<compile_context>
chip_gen: v7x
topology: tpu7x:2x2x1
jax: 0.10.0
libtpu: 0.0.40
codegen_flags: <defaults>
</compile_context>

<pallas_src>
import math

import jax
import jax.numpy as jnp
from jax.experimental import pallas as pl
from jax.experimental.pallas import tpu as pltpu


# Batch tile: 128 matches the v5e MXU (4x128x128) and keeps the f32 working
# set comfortably inside the 64-vreg file / 64 MiB v7x VMEM; it is also a
# perfectly fine (if slightly small) M tile for v6e/v7x.
TB = 128
# Lane-dense padded output width for the 1-wide Q heads.
OUT_PAD = 128
LANE = 128


def _round_up(x, m):
    return ((x + m - 1) // m) * m


def _critic_kernel(sa_ref,
                   w1_ref, b1_ref, w2_ref, b2_ref, w3_ref, b3_ref,
                   w4_ref, b4_ref, w5_ref, b5_ref, w6_ref, b6_ref,
                   q1_ref, q2_ref):
    """Fused twin-Q forward for one batch tile of sa = concat(state, action)."""
    sa = sa_ref[...]

    # ---- Q1 head: relu(sa @ W1 + b1) -> relu(. @ W2 + b2) -> . @ W3 + b3 ----
    h = jnp.dot(sa, w1_ref[...], preferred_element_type=jnp.float32)
    h = jnp.maximum(h + b1_ref[...], 0.0)
    h = jnp.dot(h, w2_ref[...], preferred_element_type=jnp.float32)
    h = jnp.maximum(h + b2_ref[...], 0.0)
    q1 = jnp.dot(h, w3_ref[...], preferred_element_type=jnp.float32) + b3_ref[...]
    q1_ref[...] = q1.astype(q1_ref.dtype)

    # ---- Q2 head: relu(sa @ W4 + b4) -> relu(. @ W5 + b5) -> . @ W6 + b6 ----
    g = jnp.dot(sa, w4_ref[...], preferred_element_type=jnp.float32)
    g = jnp.maximum(g + b4_ref[...], 0.0)
    g = jnp.dot(g, w5_ref[...], preferred_element_type=jnp.float32)
    g = jnp.maximum(g + b5_ref[...], 0.0)
    q2 = jnp.dot(g, w6_ref[...], preferred_element_type=jnp.float32) + b6_ref[...]
    q2_ref[...] = q2.astype(q2_ref.dtype)


def critic_forward(state, action, params):
    """Twin-Q critic forward.

    state:  [B, state_dim] f32
    action: [B, action_dim] f32
    params: dict with w1,w4 [S+A, 256]; w2,w5 [256, 256]; w3,w6 [256, 1];
            biases b* of shape [1, out].  (Weights stored [in, out], i.e.
            the transpose of the PyTorch nn.Linear weight.)
    Returns (q1, q2), each [B, 1] f32.
    """
    sa = jnp.concatenate([state, action], axis=1)
    b, k = sa.shape
    hidden = params["w1"].shape[1]

    k_pad = _round_up(k, LANE)
    b_pad = _round_up(b, TB)

    # Zero-pad batch and contraction dims (zeros are harmless for the matmul),
    # and lane-pad the 1-wide head weights/biases to OUT_PAD columns.
    sa_p = jnp.pad(sa, ((0, b_pad - b), (0, k_pad - k)))
    w1_p = jnp.pad(params["w1"], ((0, k_pad - k), (0, 0)))
    w4_p = jnp.pad(params["w4"], ((0, k_pad - k), (0, 0)))
    w3_p = jnp.pad(params["w3"], ((0, 0), (0, OUT_PAD - params["w3"].shape[1])))
    w6_p = jnp.pad(params["w6"], ((0, 0), (0, OUT_PAD - params["w6"].shape[1])))
    b3_p = jnp.pad(params["b3"], ((0, 0), (0, OUT_PAD - params["b3"].shape[1])))
    b6_p = jnp.pad(params["b6"], ((0, 0), (0, OUT_PAD - params["b6"].shape[1])))

    grid = (b_pad // TB,)

    def _resident(arr):
        # Whole-array block, same index every grid step -> stays in VMEM.
        return pl.BlockSpec(arr.shape, lambda i: (0,) * arr.ndim)

    sa_spec = pl.BlockSpec((TB, k_pad), lambda i: (i, 0))
    out_spec = pl.BlockSpec((TB, OUT_PAD), lambda i: (i, 0))

    in_specs = [
        sa_spec,
        _resident(w1_p), _resident(params["b1"]),
        _resident(params["w2"]), _resident(params["b2"]),
        _resident(w3_p), _resident(b3_p),
        _resident(w4_p), _resident(params["b4"]),
        _resident(params["w5"]), _resident(params["b5"]),
        _resident(w6_p), _resident(b6_p),
    ]

    weight_bytes = 4 * (
        2 * (k_pad * hidden + hidden * hidden + hidden * OUT_PAD)
        + 2 * (hidden + hidden + OUT_PAD)
    )
    cost = pl.CostEstimate(
        flops=2 * 2 * b_pad * (k_pad * hidden + hidden * hidden + hidden * OUT_PAD),
        transcendentals=0,
        bytes_accessed=4 * b_pad * k_pad + weight_bytes + 2 * 4 * b_pad * OUT_PAD,
    )

    q1_p, q2_p = pl.pallas_call(
        _critic_kernel,
        out_shape=(
            jax.ShapeDtypeStruct((b_pad, OUT_PAD), jnp.float32),
            jax.ShapeDtypeStruct((b_pad, OUT_PAD), jnp.float32),
        ),
        grid=grid,
        in_specs=in_specs,
        out_specs=(out_spec, out_spec),
        compiler_params=pltpu.CompilerParams(
            dimension_semantics=("parallel",),
        ),
        cost_estimate=cost,
    )(
        sa_p,
        w1_p, params["b1"], params["w2"], params["b2"], w3_p, b3_p,
        w4_p, params["b4"], params["w5"], params["b5"], w6_p, b6_p,
    )

    # Strip batch / lane padding: real Q values live in column 0.
    return q1_p[:b, :1], q2_p[:b, :1]


def init_critic_params(key, state_dim, action_dim, hidden=256):
    """PyTorch nn.Linear default init: U(-1/sqrt(fan_in), 1/sqrt(fan_in))."""
    keys = jax.random.split(key, 12)
    in_dim = state_dim + action_dim

    def linear(kw, kb, fan_in, fan_out):
        bound = 1.0 / math.sqrt(fan_in)
        w = jax.random.uniform(kw, (fan_in, fan_out), jnp.float32, -bound, bound)
        bias = jax.random.uniform(kb, (1, fan_out), jnp.float32, -bound, bound)
        return w, bias

    w1, b1 = linear(keys[0], keys[1], in_dim, hidden)
    w2, b2 = linear(keys[2], keys[3], hidden, hidden)
    w3, b3 = linear(keys[4], keys[5], hidden, 1)
    w4, b4 = linear(keys[6], keys[7], in_dim, hidden)
    w5, b5 = linear(keys[8], keys[9], hidden, hidden)
    w6, b6 = linear(keys[10], keys[11], hidden, 1)
    return {
        "w1": w1, "b1": b1, "w2": w2, "b2": b2, "w3": w3, "b3": b3,
        "w4": w4, "b4": b4, "w5": w5, "b5": b5, "w6": w6, "b6": b6,
    }


def critic_ref(state, action, params):
    """Pure-JAX reference of the PyTorch Critic.forward."""
    sa = jnp.concatenate([state, action], axis=1)
    q1 = jax.nn.relu(sa @ params["w1"] + params["b1"])
    q1 = jax.nn.relu(q1 @ params["w2"] + params["b2"])
    q1 = q1 @ params["w3"] + params["b3"]
    q2 = jax.nn.relu(sa @ params["w4"] + params["b4"])
    q2 = jax.nn.relu(q2 @ params["w5"] + params["b5"])
    q2 = q2 @ params["w6"] + params["b6"]
    return q1, q2


if __name__ == "__main__":
    key = jax.random.PRNGKey(0)
    k_param, k_state, k_action = jax.random.split(key, 3)

    batch = 2
    state_dim = 16
    action_dim = 8

    params = init_critic_params(k_param, state_dim, action_dim)
    state = jax.random.normal(k_state, (batch, state_dim), jnp.float32)
    action = jax.random.normal(k_action, (batch, action_dim), jnp.float32)

    q1, q2 = critic_forward(state, action, params)
    q1 = jax.block_until_ready(q1)
    q2 = jax.block_until_ready(q2)

    r1, r2 = critic_ref(state, action, params)
    assert q1.shape == (batch, 1) and q2.shape == (batch, 1)
    assert jnp.allclose(q1, r1, atol=1e-5, rtol=1e-5), "Q1 mismatch vs reference"
    assert jnp.allclose(q2, r2, atol=1e-5, rtol=1e-5), "Q2 mismatch vs reference"

    print("KERNEL_OK")
</pallas_src>

<mosaic_0001>
module attributes {stable_mosaic.version = 11 : i64} {
  func.func @_critic_kernel(%arg0: i32, %arg1: memref<128x128xf32, #tpu.memory_space<vmem>>, %arg2: memref<128x256xf32, #tpu.memory_space<vmem>>, %arg3: memref<1x256xf32, #tpu.memory_space<vmem>>, %arg4: memref<256x256xf32, #tpu.memory_space<vmem>>, %arg5: memref<1x256xf32, #tpu.memory_space<vmem>>, %arg6: memref<256x128xf32, #tpu.memory_space<vmem>>, %arg7: memref<1x128xf32, #tpu.memory_space<vmem>>, %arg8: memref<128x256xf32, #tpu.memory_space<vmem>>, %arg9: memref<1x256xf32, #tpu.memory_space<vmem>>, %arg10: memref<256x256xf32, #tpu.memory_space<vmem>>, %arg11: memref<1x256xf32, #tpu.memory_space<vmem>>, %arg12: memref<256x128xf32, #tpu.memory_space<vmem>>, %arg13: memref<1x128xf32, #tpu.memory_space<vmem>>, %arg14: memref<128x128xf32, #tpu.memory_space<vmem>>, %arg15: memref<128x128xf32, #tpu.memory_space<vmem>>) attributes {dimension_semantics = [#tpu.dimension_semantics<parallel>], iteration_bounds = array<i64: 1>, scalar_prefetch = 0 : i64, scratch_operands = 0 : i64, tpu.core_type = #tpu.core_type<tc>, window_params = [{transform_indices = @transform_0, window_bounds = array<i64: 128, 128>}, {pipeline_mode = #tpu.pipeline_mode<synchronous>, transform_indices = @transform_1, window_bounds = array<i64: 128, 256>}, {pipeline_mode = #tpu.pipeline_mode<synchronous>, transform_indices = @transform_2, window_bounds = array<i64: 1, 256>}, {pipeline_mode = #tpu.pipeline_mode<synchronous>, transform_indices = @transform_3, window_bounds = array<i64: 256, 256>}, {pipeline_mode = #tpu.pipeline_mode<synchronous>, transform_indices = @transform_4, window_bounds = array<i64: 1, 256>}, {pipeline_mode = #tpu.pipeline_mode<synchronous>, transform_indices = @transform_5, window_bounds = array<i64: 256, 128>}, {pipeline_mode = #tpu.pipeline_mode<synchronous>, transform_indices = @transform_6, window_bounds = array<i64: 1, 128>}, {pipeline_mode = #tpu.pipeline_mode<synchronous>, transform_indices = @transform_7, window_bounds = array<i64: 128, 256>}, {pipeline_mode = #tpu.pipeline_mode<synchronous>, transform_indices = @transform_8, window_bounds = array<i64: 1, 256>}, {pipeline_mode = #tpu.pipeline_mode<synchronous>, transform_indices = @transform_9, window_bounds = array<i64: 256, 256>}, {pipeline_mode = #tpu.pipeline_mode<synchronous>, transform_indices = @transform_10, window_bounds = array<i64: 1, 256>}, {pipeline_mode = #tpu.pipeline_mode<synchronous>, transform_indices = @transform_11, window_bounds = array<i64: 256, 128>}, {pipeline_mode = #tpu.pipeline_mode<synchronous>, transform_indices = @transform_12, window_bounds = array<i64: 1, 128>}, {transform_indices = @transform_13, window_bounds = array<i64: 128, 128>}, {transform_indices = @transform_14, window_bounds = array<i64: 128, 128>}]} {
    %c0 = arith.constant 0 : index
    %c0_0 = arith.constant 0 : index
    %0 = vector.load %arg1[%c0, %c0_0] : memref<128x128xf32, #tpu.memory_space<vmem>>, vector<128x128xf32>
    %c0_1 = arith.constant 0 : index
    %c0_2 = arith.constant 0 : index
    %1 = vector.load %arg2[%c0_1, %c0_2] : memref<128x256xf32, #tpu.memory_space<vmem>>, vector<128x256xf32>
    %cst = arith.constant dense<0.000000e+00> : vector<128x256xf32>
    %2 = tpu.matmul %0, %1, %cst {dimension_numbers = #tpu.dot_dimension_numbers<[1], [0], [0], [1], [0, 0, 1, 1], [], []>} : vector<128x128xf32>, vector<128x256xf32>, vector<128x256xf32> -> vector<128x256xf32>
    %c0_3 = arith.constant 0 : index
    %c0_4 = arith.constant 0 : index
    %3 = vector.load %arg3[%c0_3, %c0_4] : memref<1x256xf32, #tpu.memory_space<vmem>>, vector<1x256xf32>
    %4 = vector.broadcast %3 : vector<1x256xf32> to vector<128x256xf32>
    %5 = arith.addf %2, %4 : vector<128x256xf32>
    %cst_5 = arith.constant 0.000000e+00 : f32
    %6 = vector.broadcast %cst_5 : f32 to vector<128x256xf32>
    %7 = arith.maximumf %5, %6 : vector<128x256xf32>
    %c0_6 = arith.constant 0 : index
    %c0_7 = arith.constant 0 : index
    %8 = vector.load %arg4[%c0_6, %c0_7] : memref<256x256xf32, #tpu.memory_space<vmem>>, vector<256x256xf32>
    %cst_8 = arith.constant dense<0.000000e+00> : vector<128x256xf32>
    %9 = tpu.matmul %7, %8, %cst_8 {dimension_numbers = #tpu.dot_dimension_numbers<[1], [0], [0], [1], [0, 0, 1, 1], [], []>} : vector<128x256xf32>, vector<256x256xf32>, vector<128x256xf32> -> vector<128x256xf32>
    %c0_9 = arith.constant 0 : index
    %c0_10 = arith.constant 0 : index
    %10 = vector.load %arg5[%c0_9, %c0_10] : memref<1x256xf32, #tpu.memory_space<vmem>>, vector<1x256xf32>
    %11 = vector.broadcast %10 : vector<1x256xf32> to vector<128x256xf32>
    %12 = arith.addf %9, %11 : vector<128x256xf32>
    %cst_11 = arith.constant 0.000000e+00 : f32
    %13 = vector.broadcast %cst_11 : f32 to vector<128x256xf32>
    %14 = arith.maximumf %12, %13 : vector<128x256xf32>
    %c0_12 = arith.constant 0 : index
    %c0_13 = arith.constant 0 : index
    %15 = vector.load %arg6[%c0_12, %c0_13] : memref<256x128xf32, #tpu.memory_space<vmem>>, vector<256x128xf32>
    %cst_14 = arith.constant dense<0.000000e+00> : vector<128x128xf32>
    %16 = tpu.matmul %14, %15, %cst_14 {dimension_numbers = #tpu.dot_dimension_numbers<[1], [0], [0], [1], [0, 0, 1, 1], [], []>} : vector<128x256xf32>, vector<256x128xf32>, vector<128x128xf32> -> vector<128x128xf32>
    %c0_15 = arith.constant 0 : index
    %c0_16 = arith.constant 0 : index
    %17 = vector.load %arg7[%c0_15, %c0_16] : memref<1x128xf32, #tpu.memory_space<vmem>>, vector<1x128xf32>
    %18 = vector.broadcast %17 : vector<1x128xf32> to vector<128x128xf32>
    %19 = arith.addf %16, %18 : vector<128x128xf32>
    %c0_17 = arith.constant 0 : index
    %c0_18 = arith.constant 0 : index
    %20 = vector.load %arg14[%c0_17, %c0_18] : memref<128x128xf32, #tpu.memory_space<vmem>>, vector<128x128xf32>
    tpu.vector_store %arg14[%c0_17, %c0_18], %19 {strides = array<i32>} : memref<128x128xf32, #tpu.memory_space<vmem>>, vector<128x128xf32>,
    %c0_19 = arith.constant 0 : index
    %c0_20 = arith.constant 0 : index
    %21 = vector.load %arg8[%c0_19, %c0_20] : memref<128x256xf32, #tpu.memory_space<vmem>>, vector<128x256xf32>
    %cst_21 = arith.constant dense<0.000000e+00> : vector<128x256xf32>
    %22 = tpu.matmul %0, %21, %cst_21 {dimension_numbers = #tpu.dot_dimension_numbers<[1], [0], [0], [1], [0, 0, 1, 1], [], []>} : vector<128x128xf32>, vector<128x256xf32>, vector<128x256xf32> -> vector<128x256xf32>
    %c0_22 = arith.constant 0 : index
    %c0_23 = arith.constant 0 : index
    %23 = vector.load %arg9[%c0_22, %c0_23] : memref<1x256xf32, #tpu.memory_space<vmem>>, vector<1x256xf32>
    %24 = vector.broadcast %23 : vector<1x256xf32> to vector<128x256xf32>
    %25 = arith.addf %22, %24 : vector<128x256xf32>
    %cst_24 = arith.constant 0.000000e+00 : f32
    %26 = vector.broadcast %cst_24 : f32 to vector<128x256xf32>
    %27 = arith.maximumf %25, %26 : vector<128x256xf32>
    %c0_25 = arith.constant 0 : index
    %c0_26 = arith.constant 0 : index
    %28 = vector.load %arg10[%c0_25, %c0_26] : memref<256x256xf32, #tpu.memory_space<vmem>>, vector<256x256xf32>
    %cst_27 = arith.constant dense<0.000000e+00> : vector<128x256xf32>
    %29 = tpu.matmul %27, %28, %cst_27 {dimension_numbers = #tpu.dot_dimension_numbers<[1], [0], [0], [1], [0, 0, 1, 1], [], []>} : vector<128x256xf32>, vector<256x256xf32>, vector<128x256xf32> -> vector<128x256xf32>
    %c0_28 = arith.constant 0 : index
    %c0_29 = arith.constant 0 : index
    %30 = vector.load %arg11[%c0_28, %c0_29] : memref<1x256xf32, #tpu.memory_space<vmem>>, vector<1x256xf32>
    %31 = vector.broadcast %30 : vector<1x256xf32> to vector<128x256xf32>
    %32 = arith.addf %29, %31 : vector<128x256xf32>
    %cst_30 = arith.constant 0.000000e+00 : f32
    %33 = vector.broadcast %cst_30 : f32 to vector<128x256xf32>
    %34 = arith.maximumf %32, %33 : vector<128x256xf32>
    %c0_31 = arith.constant 0 : index
    %c0_32 = arith.constant 0 : index
    %35 = vector.load %arg12[%c0_31, %c0_32] : memref<256x128xf32, #tpu.memory_space<vmem>>, vector<256x128xf32>
    %cst_33 = arith.constant dense<0.000000e+00> : vector<128x128xf32>
    %36 = tpu.matmul %34, %35, %cst_33 {dimension_numbers = #tpu.dot_dimension_numbers<[1], [0], [0], [1], [0, 0, 1, 1], [], []>} : vector<128x256xf32>, vector<256x128xf32>, vector<128x128xf32> -> vector<128x128xf32>
    %c0_34 = arith.constant 0 : index
    %c0_35 = arith.constant 0 : index
    %37 = vector.load %arg13[%c0_34, %c0_35] : memref<1x128xf32, #tpu.memory_space<vmem>>, vector<1x128xf32>
    %38 = vector.broadcast %37 : vector<1x128xf32> to vector<128x128xf32>
    %39 = arith.addf %36, %38 : vector<128x128xf32>
    %c0_36 = arith.constant 0 : index
    %c0_37 = arith.constant 0 : index
    %40 = vector.load %arg15[%c0_36, %c0_37] : memref<128x128xf32, #tpu.memory_space<vmem>>, vector<128x128xf32>
    tpu.vector_store %arg15[%c0_36, %c0_37], %39 {strides = array<i32>} : memref<128x128xf32, #tpu.memory_space<vmem>>, vector<128x128xf32>,
    return
  }
  func.func @transform_0(%arg0: i32) -> (i32, i32) {
    %c0_i32 = arith.constant 0 : i32
    %c0_i32_0 = arith.constant 0 : i32
    return %arg0, %c0_i32 : i32, i32
  }
  func.func @transform_1(%arg0: i32) -> (i32, i32) {
    %c0_i32 = arith.constant 0 : i32
    %c0_i32_0 = arith.constant 0 : i32
    %c0_i32_1 = arith.constant 0 : i32
    return %c0_i32, %c0_i32_0 : i32, i32
  }
  func.func @transform_2(%arg0: i32) -> (i32, i32) {
    %c0_i32 = arith.constant 0 : i32
    %c0_i32_0 = arith.constant 0 : i32
    %c0_i32_1 = arith.constant 0 : i32
    return %c0_i32, %c0_i32_0 : i32, i32
  }
  func.func @transform_3(%arg0: i32) -> (i32, i32) {
    %c0_i32 = arith.constant 0 : i32
    %c0_i32_0 = arith.constant 0 : i32
    %c0_i32_1 = arith.constant 0 : i32
    return %c0_i32, %c0_i32_0 : i32, i32
  }
  func.func @transform_4(%arg0: i32) -> (i32, i32) {
    %c0_i32 = arith.constant 0 : i32
    %c0_i32_0 = arith.constant 0 : i32
    %c0_i32_1 = arith.constant 0 : i32
    return %c0_i32, %c0_i32_0 : i32, i32
  }
  func.func @transform_5(%arg0: i32) -> (i32, i32) {
    %c0_i32 = arith.constant 0 : i32
    %c0_i32_0 = arith.constant 0 : i32
    %c0_i32_1 = arith.constant 0 : i32
    return %c0_i32, %c0_i32_0 : i32, i32
  }
  func.func @transform_6(%arg0: i32) -> (i32, i32) {
    %c0_i32 = arith.constant 0 : i32
    %c0_i32_0 = arith.constant 0 : i32
    %c0_i32_1 = arith.constant 0 : i32
    return %c0_i32, %c0_i32_0 : i32, i32
  }
  func.func @transform_7(%arg0: i32) -> (i32, i32) {
    %c0_i32 = arith.constant 0 : i32
    %c0_i32_0 = arith.constant 0 : i32
    %c0_i32_1 = arith.constant 0 : i32
    return %c0_i32, %c0_i32_0 : i32, i32
  }
  func.func @transform_8(%arg0: i32) -> (i32, i32) {
    %c0_i32 = arith.constant 0 : i32
    %c0_i32_0 = arith.constant 0 : i32
    %c0_i32_1 = arith.constant 0 : i32
    return %c0_i32, %c0_i32_0 : i32, i32
  }
  func.func @transform_9(%arg0: i32) -> (i32, i32) {
    %c0_i32 = arith.constant 0 : i32
    %c0_i32_0 = arith.constant 0 : i32
    %c0_i32_1 = arith.constant 0 : i32
    return %c0_i32, %c0_i32_0 : i32, i32
  }
  func.func @transform_10(%arg0: i32) -> (i32, i32) {
    %c0_i32 = arith.constant 0 : i32
    %c0_i32_0 = arith.constant 0 : i32
    %c0_i32_1 = arith.constant 0 : i32
    return %c0_i32, %c0_i32_0 : i32, i32
  }
  func.func @transform_11(%arg0: i32) -> (i32, i32) {
    %c0_i32 = arith.constant 0 : i32
    %c0_i32_0 = arith.constant 0 : i32
    %c0_i32_1 = arith.constant 0 : i32
    return %c0_i32, %c0_i32_0 : i32, i32
  }
  func.func @transform_12(%arg0: i32) -> (i32, i32) {
    %c0_i32 = arith.constant 0 : i32
    %c0_i32_0 = arith.constant 0 : i32
    %c0_i32_1 = arith.constant 0 : i32
    return %c0_i32, %c0_i32_0 : i32, i32
  }
  func.func @transform_13(%arg0: i32) -> (i32, i32) {
    %c0_i32 = arith.constant 0 : i32
    %c0_i32_0 = arith.constant 0 : i32
    return %arg0, %c0_i32 : i32, i32
  }
  func.func @transform_14(%arg0: i32) -> (i32, i32) {
    %c0_i32 = arith.constant 0 : i32
    %c0_i32_0 = arith.constant 0 : i32
    return %arg0, %c0_i32 : i32, i32
  }
}

</mosaic_0001>

<llo_original>
// kernel: tpu_custom_call.1
$region0: #{tpu_custom_call.1}
  #allocation0 [shape = 'u32[]', space=smem, size = 0x4, offset = 0x4, fixed_abs, tag = 'smem constant byte address 0x4 - core index']
  #allocation1 [shape = 'u32[144,128]{1,0:T(1,128)}', space=vmem, size = 0x12000, scoped, tag = 'internal scratch']
  %s0 = inlined_call_operand.hbm [shape: f32[128,128], index: 0, kind: input, shape index: {}]
  %s1 = inlined_call_operand.hbm [shape: f32[128,256], index: 1, kind: input, shape index: {}]
  %s2 = inlined_call_operand.vmem [shape: f32[1,256], index: 2, kind: input, shape index: {}]
  %s3 = inlined_call_operand.hbm [shape: f32[256,256], index: 3, kind: input, shape index: {}]
  %s4 = inlined_call_operand.vmem [shape: f32[1,256], index: 4, kind: input, shape index: {}]
  %s5 = inlined_call_operand.hbm [shape: f32[256,128], index: 5, kind: input, shape index: {}]
  %s6 = inlined_call_operand.vmem [shape: f32[1,128], index: 6, kind: input, shape index: {}]
  %s7 = inlined_call_operand.hbm [shape: f32[128,256], index: 7, kind: input, shape index: {}]
  %s8 = inlined_call_operand.vmem [shape: f32[1,256], index: 8, kind: input, shape index: {}]
  %s9 = inlined_call_operand.hbm [shape: f32[256,256], index: 9, kind: input, shape index: {}]
  %s10 = inlined_call_operand.vmem [shape: f32[1,256], index: 10, kind: input, shape index: {}]
  %s11 = inlined_call_operand.hbm [shape: f32[256,128], index: 11, kind: input, shape index: {}]
  %s12 = inlined_call_operand.vmem [shape: f32[1,128], index: 12, kind: input, shape index: {}]
  %s13 = inlined_call_operand.hbm [shape: f32[128,128], index: 13, kind: output, shape index: {0}]
  %s14 = inlined_call_operand.hbm [shape: f32[128,128], index: 14, kind: output, shape index: {1}]
  %15 = xla_tuple %s13, %s14
  %s16 = sld [smem:[#allocation0]]
  $region98: #{tpu_custom_call.1} parent=0
    _
  %s18 = ssub.s32 1, %s16
  %s19 = scalar_select 0, %s18, %s16
  $region1: #{tpu_custom_call.1} parent=0
    #allocation2 [shape = 'u8[65536]{0}', space=vmem, size = 0x10000, scoped, tag = 'input window, operand 0, single buffered']
    #allocation3 [shape = 's32[1]{0}', space=sflag, size = 0x4, scoped, tag = 'scoped memory for tpu_custom_call.1']
    #allocation4 [shape = 's32[1]{0}', space=sflag, size = 0x4, scoped, tag = 'scoped memory for tpu_custom_call.1']
    #allocation5 [shape = 'u8[131072]{0}', space=vmem, size = 0x20000, scoped, tag = 'input window, operand 1, single buffered']
    #allocation6 [shape = 's32[1]{0}', space=sflag, size = 0x4, scoped, tag = 'scoped memory for tpu_custom_call.1']
    #allocation7 [shape = 'u8[262144]{0}', space=vmem, size = 0x40000, scoped, tag = 'input window, operand 3, single buffered']
    #allocation8 [shape = 'u8[131072]{0}', space=vmem, size = 0x20000, scoped, tag = 'input window, operand 5, single buffered']
    #allocation9 [shape = 's32[1]{0}', space=sflag, size = 0x4, scoped, tag = 'scoped memory for tpu_custom_call.1']
    #allocation10 [shape = 'u8[131072]{0}', space=vmem, size = 0x20000, scoped, tag = 'input window, operand 7, single buffered']
    #allocation11 [shape = 'u8[262144]{0}', space=vmem, size = 0x40000, scoped, tag = 'input window, operand 9, single buffered']
    #allocation12 [shape = 's32[1]{0}', space=sflag, size = 0x4, scoped, tag = 'scoped memory for tpu_custom_call.1']
    #allocation13 [shape = 'u8[131072]{0}', space=vmem, size = 0x20000, scoped, tag = 'input window, operand 11, single buffered']
    #allocation14 [shape = 'u8[65536]{0}', space=vmem, size = 0x10000, scoped, tag = 'output window, operand 0, single buffered']
    #allocation15 [shape = 'u8[65536]{0}', space=vmem, size = 0x10000, scoped, tag = 'output window, operand 1, single buffered']
    #allocation16 [shape = 's32[1]{0}', space=sflag, size = 0x4, scoped, tag = 'scoped memory for tpu_custom_call.1']
    %20 = vsyncpa [#allocation3], 0
    %21 = vsyncpa [#allocation6], 0
    %22 = vsyncpa [#allocation9], 0
    %23 = vsyncpa [#allocation12], 0
    %24 = vsyncpa [#allocation4], 0
    %25 = vsyncpa [#allocation16], 0
    // Predicated region
    $region2: #{tpu_custom_call.1} parent=1 // pred_check
      _
    $region3: #{tpu_custom_call.1} parent=1 // pred_check_branch
      %27 = sbr.rel (0) target = $region5
    $region4: #{tpu_custom_call.1} parent=1 // pred_region
      %s29 = ssub.s32 2048, 2048
      %30 = vsyncadd [#allocation3], %s29
      %s31 = sshll.u32 [#allocation2], 4
      %s32 = int_to_ptr.vmem [resolvable:$true] %s31
      %37 = dma.hbm_to_vmem [thread:$0]  %s0, 2048, %s32, [#allocation3], 128, 128, 8
    $region5: #{tpu_custom_call.1} parent=1 // pred_fallthru
      _
    // Predicated region
    $region6: #{tpu_custom_call.1} parent=1 // pred_check
      _
    $region7: #{tpu_custom_call.1} parent=1 // pred_check_branch
      %39 = sbr.rel (0) target = $region9
    $region8: #{tpu_custom_call.1} parent=1 // pred_region
      %s41 = ssub.s32 4096, 4096
      %42 = vsyncadd [#allocation6], %s41
      %s43 = sshll.u32 [#allocation5], 4
      %s44 = int_to_ptr.vmem [resolvable:$true] %s43
      %49 = dma.hbm_to_vmem [thread:$0]  %s1, 4096, %s44, [#allocation6], 256, 256, 16
    $region9: #{tpu_custom_call.1} parent=1 // pred_fallthru
      _
    // Predicated region
    $region10: #{tpu_custom_call.1} parent=1 // pred_check
      _
    $region11: #{tpu_custom_call.1} parent=1 // pred_check_branch
      %51 = sbr.rel (0) target = $region13
    $region12: #{tpu_custom_call.1} parent=1 // pred_region
      _
    $region13: #{tpu_custom_call.1} parent=1 // pred_fallthru
      _
    // Predicated region
    $region14: #{tpu_custom_call.1} parent=1 // pred_check
      _
    $region15: #{tpu_custom_call.1} parent=1 // pred_check_branch
      %53 = sbr.rel (0) target = $region17
    $region16: #{tpu_custom_call.1} parent=1 // pred_region
      %s55 = ssub.s32 8192, 8192
      %56 = vsyncadd [#allocation6], %s55
      %s57 = sshll.u32 [#allocation7], 4
      %s58 = int_to_ptr.vmem [resolvable:$true] %s57
      %63 = dma.hbm_to_vmem [thread:$0]  %s3, 8192, %s58, [#allocation6], 256, 256, 16
    $region17: #{tpu_custom_call.1} parent=1 // pred_fallthru
      _
    // Predicated region
    $region18: #{tpu_custom_call.1} parent=1 // pred_check
      _
    $region19: #{tpu_custom_call.1} parent=1 // pred_check_branch
      %65 = sbr.rel (0) target = $region21
    $region20: #{tpu_custom_call.1} parent=1 // pred_region
      _
    $region21: #{tpu_custom_call.1} parent=1 // pred_fallthru
      _
    // Predicated region
    $region22: #{tpu_custom_call.1} parent=1 // pred_check
      _
    $region23: #{tpu_custom_call.1} parent=1 // pred_check_branch
      %67 = sbr.rel (0) target = $region25
    $region24: #{tpu_custom_call.1} parent=1 // pred_region
      %s69 = ssub.s32 4096, 4096
      %70 = vsyncadd [#allocation9], %s69
      %s71 = sshll.u32 [#allocation8], 4
      %s72 = int_to_ptr.vmem [resolvable:$true] %s71
      %77 = dma.hbm_to_vmem [thread:$0]  %s5, 4096, %s72, [#allocation9], 128, 128, 8
    $region25: #{tpu_custom_call.1} parent=1 // pred_fallthru
      _
    // Predicated region
    $region26: #{tpu_custom_call.1} parent=1 // pred_check
      _
    $region27: #{tpu_custom_call.1} parent=1 // pred_check_branch
      %79 = sbr.rel (0) target = $region29
    $region28: #{tpu_custom_call.1} parent=1 // pred_region
      _
    $region29: #{tpu_custom_call.1} parent=1 // pred_fallthru
      _
    // Predicated region
    $region30: #{tpu_custom_call.1} parent=1 // pred_check
      _
    $region31: #{tpu_custom_call.1} parent=1 // pred_check_branch
      %81 = sbr.rel (0) target = $region33
    $region32: #{tpu_custom_call.1} parent=1 // pred_region
      %s83 = ssub.s32 4096, 4096
      %84 = vsyncadd [#allocation9], %s83
      %s85 = sshll.u32 [#allocation10], 4
      %s86 = int_to_ptr.vmem [resolvable:$true] %s85
      %91 = dma.hbm_to_vmem [thread:$0]  %s7, 4096, %s86, [#allocation9], 256, 256, 16
    $region33: #{tpu_custom_call.1} parent=1 // pred_fallthru
      _
    // Predicated region
    $region34: #{tpu_custom_call.1} parent=1 // pred_check
      _
    $region35: #{tpu_custom_call.1} parent=1 // pred_check_branch
      %93 = sbr.rel (0) target = $region37
    $region36: #{tpu_custom_call.1} parent=1 // pred_region
      _
    $region37: #{tpu_custom_call.1} parent=1 // pred_fallthru
      _
    // Predicated region
    $region38: #{tpu_custom_call.1} parent=1 // pred_check
      _
    $region39: #{tpu_custom_call.1} parent=1 // pred_check_branch
      %95 = sbr.rel (0) target = $region41
    $region40: #{tpu_custom_call.1} parent=1 // pred_region
      %s97 = ssub.s32 8192, 8192
      %98 = vsyncadd [#allocation12], %s97
      %s99 = sshll.u32 [#allocation11], 4
      %s100 = int_to_ptr.vmem [resolvable:$true] %s99
      %105 = dma.hbm_to_vmem [thread:$0]  %s9, 8192, %s100, [#allocation12], 256, 256, 16
    $region41: #{tpu_custom_call.1} parent=1 // pred_fallthru
      _
    // Predicated region
    $region42: #{tpu_custom_call.1} parent=1 // pred_check
      _
    $region43: #{tpu_custom_call.1} parent=1 // pred_check_branch
      %107 = sbr.rel (0) target = $region45
    $region44: #{tpu_custom_call.1} parent=1 // pred_region
      _
    $region45: #{tpu_custom_call.1} parent=1 // pred_fallthru
      _
    // Predicated region
    $region46: #{tpu_custom_call.1} parent=1 // pred_check
      _
    $region47: #{tpu_custom_call.1} parent=1 // pred_check_branch
      %109 = sbr.rel (0) target = $region49
    $region48: #{tpu_custom_call.1} parent=1 // pred_region
      %s111 = ssub.s32 4096, 4096
      %112 = vsyncadd [#allocation12], %s111
      %s113 = sshll.u32 [#allocation13], 4
      %s114 = int_to_ptr.vmem [resolvable:$true] %s113
      %119 = dma.hbm_to_vmem [thread:$0]  %s11, 4096, %s114, [#allocation12], 128, 128, 8
    $region49: #{tpu_custom_call.1} parent=1 // pred_fallthru
      _
    // Predicated region
    $region50: #{tpu_custom_call.1} parent=1 // pred_check
      _
    $region51: #{tpu_custom_call.1} parent=1 // pred_check_branch
      %121 = sbr.rel (0) target = $region53
    $region52: #{tpu_custom_call.1} parent=1 // pred_region
      _
    $region53: #{tpu_custom_call.1} parent=1 // pred_fallthru
      _
    // Predicated region
    $region54: #{tpu_custom_call.1} parent=1 // pred_check
      _
    $region55: #{tpu_custom_call.1} parent=1 // pred_check_branch
      %123 = sbr.rel (0) target = $region57
    $region56: #{tpu_custom_call.1} parent=1 // pred_region
      %124 = dma.done [#allocation3], 2048
    $region57: #{tpu_custom_call.1} parent=1 // pred_fallthru
      _
    // Predicated region
    $region58: #{tpu_custom_call.1} parent=1 // pred_check
      _
    $region59: #{tpu_custom_call.1} parent=1 // pred_check_branch
      %126 = sbr.rel (0) target = $region61
    $region60: #{tpu_custom_call.1} parent=1 // pred_region
      %127 = dma.done [#allocation6], 4096
    $region61: #{tpu_custom_call.1} parent=1 // pred_fallthru
      _
    // Predicated region
    $region62: #{tpu_custom_call.1} parent=1 // pred_check
      _
    $region63: #{tpu_custom_call.1} parent=1 // pred_check_branch
      %129 = sbr.rel (0) target = $region65
    $region64: #{tpu_custom_call.1} parent=1 // pred_region
      %130 = dma.done [#allocation6], 8192
    $region65: #{tpu_custom_call.1} parent=1 // pred_fallthru
      _
    // Predicated region
    $region66: #{tpu_custom_call.1} parent=1 // pred_check
      _
    $region67: #{tpu_custom_call.1} parent=1 // pred_check_branch
      %132 = sbr.rel (0) target = $region69
    $region68: #{tpu_custom_call.1} parent=1 // pred_region
      %133 = dma.done [#allocation9], 4096
    $region69: #{tpu_custom_call.1} parent=1 // pred_fallthru
      _
    // Predicated region
    $region70: #{tpu_custom_call.1} parent=1 // pred_check
      _
    $region71: #{tpu_custom_call.1} parent=1 // pred_check_branch
      %135 = sbr.rel (0) target = $region73
    $region72: #{tpu_custom_call.1} parent=1 // pred_region
      %136 = dma.done [#allocation9], 4096
    $region73: #{tpu_custom_call.1} parent=1 // pred_fallthru
      _
    // Predicated region
    $region74: #{tpu_custom_call.1} parent=1 // pred_check
      _
    $region75: #{tpu_custom_call.1} parent=1 // pred_check_branch
      %138 = sbr.rel (0) target = $region77
    $region76: #{tpu_custom_call.1} parent=1 // pred_region
      %139 = dma.done [#allocation12], 8192
    $region77: #{tpu_custom_call.1} parent=1 // pred_fallthru
      _
    // Predicated region
    $region78: #{tpu_custom_call.1} parent=1 // pred_check
      _
    $region79: #{tpu_custom_call.1} parent=1 // pred_check_branch
      %141 = sbr.rel (0) target = $region81
    $region80: #{tpu_custom_call.1} parent=1 // pred_region
      %142 = dma.done [#allocation12], 4096
    $region81: #{tpu_custom_call.1} parent=1 // pred_fallthru
      _
    %v143 = vld [vmem:[#allocation2] sm:$0xff]
    %v144 = vld [vmem:[#allocation2 + $0x8] sm:$0xff]
    %v145 = vld [vmem:[#allocation2 + $0x10] sm:$0xff]
    %v146 = vld [vmem:[#allocation2 + $0x18] sm:$0xff]
    %v147 = vld [vmem:[#allocation2 + $0x20] sm:$0xff]
    %v148 = vld [vmem:[#allocation2 + $0x28] sm:$0xff]
    %v149 = vld [vmem:[#allocation2 + $0x30] sm:$0xff]
    %v150 = vld [vmem:[#allocation2 + $0x38] sm:$0xff]
    %v151 = vld [vmem:[#allocation2 + $0x40] sm:$0xff]
    %v152 = vld [vmem:[#allocation2 + $0x48] sm:$0xff]
    %v153 = vld [vmem:[#allocation2 + $0x50] sm:$0xff]
    %v154 = vld [vmem:[#allocation2 + $0x58] sm:$0xff]
    %v155 = vld [vmem:[#allocation2 + $0x60] sm:$0xff]
    %v156 = vld [vmem:[#allocation2 + $0x68] sm:$0xff]
    %v157 = vld [vmem:[#allocation2 + $0x70] sm:$0xff]
    %v158 = vld [vmem:[#allocation2 + $0x78] sm:$0xff]
    %v159 = vld [vmem:[#allocation5] sm:$0xff]
    %v160 = vld [vmem:[#allocation5 + $0x8] sm:$0xff]
    %v161 = vld [vmem:[#allocation5 + $0x10] sm:$0xff]
    %v162 = vld [vmem:[#allocation5 + $0x18] sm:$0xff]
    %v163 = vld [vmem:[#allocation5 + $0x20] sm:$0xff]
    %v164 = vld [vmem:[#allocation5 + $0x28] sm:$0xff]
    %v165 = vld [vmem:[#allocation5 + $0x30] sm:$0xff]
    %v166 = vld [vmem:[#allocation5 + $0x38] sm:$0xff]
    %v167 = vld [vmem:[#allocation5 + $0x40] sm:$0xff]
    %v168 = vld [vmem:[#allocation5 + $0x48] sm:$0xff]
    %v169 = vld [vmem:[#allocation5 + $0x50] sm:$0xff]
    %v170 = vld [vmem:[#allocation5 + $0x58] sm:$0xff]
    %v171 = vld [vmem:[#allocation5 + $0x60] sm:$0xff]
    %v172 = vld [vmem:[#allocation5 + $0x68] sm:$0xff]
    %v173 = vld [vmem:[#allocation5 + $0x70] sm:$0xff]
    %v174 = vld [vmem:[#allocation5 + $0x78] sm:$0xff]
    %v175 = vld [vmem:[#allocation5 + $0x80] sm:$0xff]
    %v176 = vld [vmem:[#allocation5 + $0x88] sm:$0xff]
    %v177 = vld [vmem:[#allocation5 + $0x90] sm:$0xff]
    %v178 = vld [vmem:[#allocation5 + $0x98] sm:$0xff]
    %v179 = vld [vmem:[#allocation5 + $0xa0] sm:$0xff]
    %v180 = vld [vmem:[#allocation5 + $0xa8] sm:$0xff]
    %v181 = vld [vmem:[#allocation5 + $0xb0] sm:$0xff]
    %v182 = vld [vmem:[#allocation5 + $0xb8] sm:$0xff]
    %v183 = vld [vmem:[#allocation5 + $0xc0] sm:$0xff]
    %v184 = vld [vmem:[#allocation5 + $0xc8] sm:$0xff]
    %v185 = vld [vmem:[#allocation5 + $0xd0] sm:$0xff]
    %v186 = vld [vmem:[#allocation5 + $0xd8] sm:$0xff]
    %v187 = vld [vmem:[#allocation5 + $0xe0] sm:$0xff]
    %v188 = vld [vmem:[#allocation5 + $0xe8] sm:$0xff]
    %v189 = vld [vmem:[#allocation5 + $0xf0] sm:$0xff]
    %v190 = vld [vmem:[#allocation5 + $0xf8] sm:$0xff]
    %v191 = vld [vmem:[%s2] sm:$0x3]
    %v193 = vlaneseq
    %v194 = vshrl.u32 %v193, 7
    %v195 = vsub.s32 0, %v194
    %v196 = vrot.slane %v191, %v195
    %v197 = vlaneseq
    %v198 = vshrl.u32 %v197, 7
    %v199 = vsub.s32 1, %v198
    %v200 = vrot.slane %v191, %v199
    %203 = vmatprep.subr.mxu0 %v160
    %204 = vmatpush1.msra.mxu0 %v159
    %205 = vmatprep.subr.mxu0 %v162
    %206 = vmatpush1.msra.mxu0 %v161
    %207 = vmatprep.subr.mxu0 %v164
    %208 = vmatpush1.msra.mxu0 %v163
    %209 = vmatprep.subr.mxu0 %v166
    %210 = vmatpush1.msra.mxu0 %v165
    %211 = vmatprep.subr.mxu0 %v168
    %212 = vmatpush1.msra.mxu0 %v167
    %213 = vmatprep.subr.mxu0 %v170
    %214 = vmatpush1.msra.mxu0 %v169
    %215 = vmatprep.subr.mxu0 %v172
    %216 = vmatpush1.msra.mxu0 %v171
    %217 = vmatprep.subr.mxu0 %v174
    %218 = vmatpush1.msra.mxu0 %v173
    %219 = vmatprep.subr.mxu0 %v176
    %220 = vmatpush1.msra.mxu0 %v175
    %221 = vmatprep.subr.mxu0 %v178
    %222 = vmatpush1.msra.mxu0 %v177
    %223 = vmatprep.subr.mxu0 %v180
    %224 = vmatpush1.msra.mxu0 %v179
    %225 = vmatprep.subr.mxu0 %v182
    %226 = vmatpush1.msra.mxu0 %v181
    %227 = vmatprep.subr.mxu0 %v184
    %228 = vmatpush1.msra.mxu0 %v183
    %229 = vmatprep.subr.mxu0 %v186
    %230 = vmatpush1.msra.mxu0 %v185
    %231 = vmatprep.subr.mxu0 %v188
    %232 = vmatpush1.msra.mxu0 %v187
    %233 = vmatprep.subr.mxu0 %v190
    %234 = vmatpush1.msra.mxu0 %v189
    %235 = vmatprep.subr.mxu0 0.0
    %236 = vmatpush1.msra.mxu0 0.0
    %237 = vmatprep.subr.mxu0 0.0
    %238 = vmatpush1.msra.mxu0 0.0
    %239 = vmatprep.subr.mxu0 0.0
    %240 = vmatpush1.msra.mxu0 0.0
    %241 = vmatprep.subr.mxu0 0.0
    %242 = vmatpush1.msra.mxu0 0.0
    %243 = vmatprep.subr.mxu0 0.0
    %244 = vmatpush1.msra.mxu0 0.0
    %245 = vmatprep.subr.mxu0 0.0
    %246 = vmatpush1.msra.mxu0 0.0
    %247 = vmatprep.subr.mxu0 0.0
    %248 = vmatpush1.msra.mxu0 0.0
    %249 = vmatprep.subr.mxu0 0.0
    %250 = vmatpush1.msra.mxu0 0.0
    %251 = vmatprep.subr.mxu0 0.0
    %252 = vmatpush1.msra.mxu0 0.0
    %253 = vmatprep.subr.mxu0 0.0
    %254 = vmatpush1.msra.mxu0 0.0
    %255 = vmatprep.subr.mxu0 0.0
    %256 = vmatpush1.msra.mxu0 0.0
    %257 = vmatprep.subr.mxu0 0.0
    %258 = vmatpush1.msra.mxu0 0.0
    %259 = vmatprep.subr.mxu0 0.0
    %260 = vmatpush1.msra.mxu0 0.0
    %261 = vmatprep.subr.mxu0 0.0
    %262 = vmatpush1.msra.mxu0 0.0
    %263 = vmatprep.subr.mxu0 0.0
    %264 = vmatpush1.msra.mxu0 0.0
    %265 = vmatprep.subr.mxu0 0.0
    %266 = vmatpush1.msra.mxu0 0.0
    %267 = vmatprep.mubr.f32.mxu0 0.0
    %268 = vmatmul.mubr.f32.gmra.mrb[0].mxu0 %v143
    %v269 = vpop.f32.mrb[0].mxu0
    %v270 = vadd.f32 %v196, %v269
    %v271 = vpop.f32.mrb[0].mxu0
    %v272 = vadd.f32 %v200, %v271
    %273 = vmatprep.mubr.f32.mxu0 0.0
    %274 = vmatmul.mubr.f32.gmra.mrb[0].mxu0 %v144
    %v275 = vpop.f32.mrb[0].mxu0
    %v276 = vadd.f32 %v196, %v275
    %v277 = vpop.f32.mrb[0].mxu0
    %v278 = vadd.f32 %v200, %v277
    %279 = vmatprep.mubr.f32.mxu0 0.0
    %280 = vmatmul.mubr.f32.gmra.mrb[0].mxu0 %v145
    %v281 = vpop.f32.mrb[0].mxu0
    %v282 = vadd.f32 %v196, %v281
    %v283 = vpop.f32.mrb[0].mxu0
    %v284 = vadd.f32 %v200, %v283
    %285 = vmatprep.mubr.f32.mxu0 0.0
    %286 = vmatmul.mubr.f32.gmra.mrb[0].mxu0 %v146
    %v287 = vpop.f32.mrb[0].mxu0
    %v288 = vadd.f32 %v196, %v287
    %v289 = vpop.f32.mrb[0].mxu0
    %v290 = vadd.f32 %v200, %v289
    %291 = vmatprep.mubr.f32.mxu0 0.0
    %292 = vmatmul.mubr.f32.gmra.mrb[0].mxu0 %v147
    %v293 = vpop.f32.mrb[0].mxu0
    %v294 = vadd.f32 %v196, %v293
    %v295 = vpop.f32.mrb[0].mxu0
    %v296 = vadd.f32 %v200, %v295
    %297 = vmatprep.mubr.f32.mxu0 0.0
    %298 = vmatmul.mubr.f32.gmra.mrb[0].mxu0 %v148
    %v299 = vpop.f32.mrb[0].mxu0
    %v300 = vadd.f32 %v196, %v299
    %v301 = vpop.f32.mrb[0].mxu0
    %v302 = vadd.f32 %v200, %v301
    %303 = vmatprep.mubr.f32.mxu0 0.0
    %304 = vmatmul.mubr.f32.gmra.mrb[0].mxu0 %v149
    %v305 = vpop.f32.mrb[0].mxu0
    %v306 = vadd.f32 %v196, %v305
    %v307 = vpop.f32.mrb[0].mxu0
    %v308 = vadd.f32 %v200, %v307
    %309 = vmatprep.mubr.f32.mxu0 0.0
    %310 = vmatmul.mubr.f32.gmra.mrb[0].mxu0 %v150
    %v311 = vpop.f32.mrb[0].mxu0
    %v312 = vadd.f32 %v196, %v311
    %v313 = vpop.f32.mrb[0].mxu0
    %v314 = vadd.f32 %v200, %v313
    %315 = vmatprep.mubr.f32.mxu0 0.0
    %316 = vmatmul.mubr.f32.gmra.mrb[0].mxu0 %v151
    %v317 = vpop.f32.mrb[0].mxu0
    %v318 = vadd.f32 %v196, %v317
    %v319 = vpop.f32.mrb[0].mxu0
    %v320 = vadd.f32 %v200, %v319
    %321 = vmatprep.mubr.f32.mxu0 0.0
    %322 = vmatmul.mubr.f32.gmra.mrb[0].mxu0 %v152
    %v323 = vpop.f32.mrb[0].mxu0
    %v324 = vadd.f32 %v196, %v323
    %v325 = vpop.f32.mrb[0].mxu0
    %v326 = vadd.f32 %v200, %v325
    %327 = vmatprep.mubr.f32.mxu0 0.0
    %328 = vmatmul.mubr.f32.gmra.mrb[0].mxu0 %v153
    %v329 = vpop.f32.mrb[0].mxu0
    %v330 = vadd.f32 %v196, %v329
    %v331 = vpop.f32.mrb[0].mxu0
    %v332 = vadd.f32 %v200, %v331
    %333 = vmatprep.mubr.f32.mxu0 0.0
    %334 = vmatmul.mubr.f32.gmra.mrb[0].mxu0 %v154
    %v335 = vpop.f32.mrb[0].mxu0
    %v336 = vadd.f32 %v196, %v335
    %v337 = vpop.f32.mrb[0].mxu0
    %v338 = vadd.f32 %v200, %v337
    %339 = vmatprep.mubr.f32.mxu0 0.0
    %340 = vmatmul.mubr.f32.gmra.mrb[0].mxu0 %v155
    %v341 = vpop.f32.mrb[0].mxu0
    %v342 = vadd.f32 %v196, %v341
    %v343 = vpop.f32.mrb[0].mxu0
    %v344 = vadd.f32 %v200, %v343
    %345 = vmatprep.mubr.f32.mxu0 0.0
    %346 = vmatmul.mubr.f32.gmra.mrb[0].mxu0 %v156
    %v347 = vpop.f32.mrb[0].mxu0
    %v348 = vadd.f32 %v196, %v347
    %v349 = vpop.f32.mrb[0].mxu0
    %v350 = vadd.f32 %v200, %v349
    %351 = vmatprep.mubr.f32.mxu0 0.0
    %352 = vmatmul.mubr.f32.gmra.mrb[0].mxu0 %v157
    %v353 = vpop.f32.mrb[0].mxu0
    %v354 = vadd.f32 %v196, %v353
    %v355 = vpop.f32.mrb[0].mxu0
    %v356 = vadd.f32 %v200, %v355
    %357 = vmatprep.mubr.f32.mxu0 0.0
    %358 = vmatmul.mubr.f32.gmra.mrb[0].mxu0 %v158
    %v359 = vpop.f32.mrb[0].mxu0
    %v360 = vadd.f32 %v196, %v359
    %v361 = vpop.f32.mrb[0].mxu0
    %v362 = vadd.f32 %v200, %v361
    %363 = vdwg.mxu0
    %v364 = vmax.f32 %v270, 0.0
    %v365 = vmax.f32 %v272, 0.0
    %v366 = vmax.f32 %v276, 0.0
    %v367 = vmax.f32 %v278, 0.0
    %v368 = vmax.f32 %v282, 0.0
    %v369 = vmax.f32 %v284, 0.0
    %v370 = vmax.f32 %v288, 0.0
    %v371 = vmax.f32 %v290, 0.0
    %v372 = vmax.f32 %v294, 0.0
    %v373 = vmax.f32 %v296, 0.0
    %v374 = vmax.f32 %v300, 0.0
    %v375 = vmax.f32 %v302, 0.0
    %v376 = vmax.f32 %v306, 0.0
    %v377 = vmax.f32 %v308, 0.0
    %v378 = vmax.f32 %v312, 0.0
    %v379 = vmax.f32 %v314, 0.0
    %v380 = vmax.f32 %v318, 0.0
    %v381 = vmax.f32 %v320, 0.0
    %v382 = vmax.f32 %v324, 0.0
    %v383 = vmax.f32 %v326, 0.0
    %v384 = vmax.f32 %v330, 0.0
    %v385 = vmax.f32 %v332, 0.0
    %v386 = vmax.f32 %v336, 0.0
    %v387 = vmax.f32 %v338, 0.0
    %v388 = vmax.f32 %v342, 0.0
    %v389 = vmax.f32 %v344, 0.0
    %v390 = vmax.f32 %v348, 0.0
    %v391 = vmax.f32 %v350, 0.0
    %v392 = vmax.f32 %v354, 0.0
    %v393 = vmax.f32 %v356, 0.0
    %v394 = vmax.f32 %v360, 0.0
    %v395 = vmax.f32 %v362, 0.0
    %v396 = vld [vmem:[#allocation7] sm:$0xff]
    %v397 = vld [vmem:[#allocation7 + $0x8] sm:$0xff]
    %v398 = vld [vmem:[#allocation7 + $0x10] sm:$0xff]
    %v399 = vld [vmem:[#allocation7 + $0x18] sm:$0xff]
    %v400 = vld [vmem:[#allocation7 + $0x20] sm:$0xff]
    %v401 = vld [vmem:[#allocation7 + $0x28] sm:$0xff]
    %v402 = vld [vmem:[#allocation7 + $0x30] sm:$0xff]
    %v403 = vld [vmem:[#allocation7 + $0x38] sm:$0xff]
    %v404 = vld [vmem:[#allocation7 + $0x40] sm:$0xff]
    %v405 = vld [vmem:[#allocation7 + $0x48] sm:$0xff]
    %v406 = vld [vmem:[#allocation7 + $0x50] sm:$0xff]
    %v407 = vld [vmem:[#allocation7 + $0x58] sm:$0xff]
    %v408 = vld [vmem:[#allocation7 + $0x60] sm:$0xff]
    %v409 = vld [vmem:[#allocation7 + $0x68] sm:$0xff]
    %v410 = vld [vmem:[#allocation7 + $0x70] sm:$0xff]
    %v411 = vld [vmem:[#allocation7 + $0x78] sm:$0xff]
    %v412 = vld [vmem:[#allocation7 + $0x80] sm:$0xff]
    %v413 = vld [vmem:[#allocation7 + $0x88] sm:$0xff]
    %v414 = vld [vmem:[#allocation7 + $0x90] sm:$0xff]
    %v415 = vld [vmem:[#allocation7 + $0x98] sm:$0xff]
    %v416 = vld [vmem:[#allocation7 + $0xa0] sm:$0xff]
    %v417 = vld [vmem:[#allocation7 + $0xa8] sm:$0xff]
    %v418 = vld [vmem:[#allocation7 + $0xb0] sm:$0xff]
    %v419 = vld [vmem:[#allocation7 + $0xb8] sm:$0xff]
    %v420 = vld [vmem:[#allocation7 + $0xc0] sm:$0xff]
    %v421 = vld [vmem:[#allocation7 + $0xc8] sm:$0xff]
    %v422 = vld [vmem:[#allocation7 + $0xd0] sm:$0xff]
    %v423 = vld [vmem:[#allocation7 + $0xd8] sm:$0xff]
    %v424 = vld [vmem:[#allocation7 + $0xe0] sm:$0xff]
    %v425 = vld [vmem:[#allocation7 + $0xe8] sm:$0xff]
    %v426 = vld [vmem:[#allocation7 + $0xf0] sm:$0xff]
    %v427 = vld [vmem:[#allocation7 + $0xf8] sm:$0xff]
    %v428 = vld [vmem:[#allocation7 + $0x100] sm:$0xff]
    %v429 = vld [vmem:[#allocation7 + $0x108] sm:$0xff]
    %v430 = vld [vmem:[#allocation7 + $0x110] sm:$0xff]
    %v431 = vld [vmem:[#allocation7 + $0x118] sm:$0xff]
    %v432 = vld [vmem:[#allocation7 + $0x120] sm:$0xff]
    %v433 = vld [vmem:[#allocation7 + $0x128] sm:$0xff]
    %v434 = vld [vmem:[#allocation7 + $0x130] sm:$0xff]
    %v435 = vld [vmem:[#allocation7 + $0x138] sm:$0xff]
    %v436 = vld [vmem:[#allocation7 + $0x140] sm:$0xff]
    %v437 = vld [vmem:[#allocation7 + $0x148] sm:$0xff]
    %v438 = vld [vmem:[#allocation7 + $0x150] sm:$0xff]
    %v439 = vld [vmem:[#allocation7 + $0x158] sm:$0xff]
    %v440 = vld [vmem:[#allocation7 + $0x160] sm:$0xff]
    %v441 = vld [vmem:[#allocation7 + $0x168] sm:$0xff]
    %v442 = vld [vmem:[#allocation7 + $0x170] sm:$0xff]
    %v443 = vld [vmem:[#allocation7 + $0x178] sm:$0xff]
    %v444 = vld [vmem:[#allocation7 + $0x180] sm:$0xff]
    %v445 = vld [vmem:[#allocation7 + $0x188] sm:$0xff]
    %v446 = vld [vmem:[#allocation7 + $0x190] sm:$0xff]
    %v447 = vld [vmem:[#allocation7 + $0x198] sm:$0xff]
    %v448 = vld [vmem:[#allocation7 + $0x1a0] sm:$0xff]
    %v449 = vld [vmem:[#allocation7 + $0x1a8] sm:$0xff]
    %v450 = vld [vmem:[#allocation7 + $0x1b0] sm:$0xff]
    %v451 = vld [vmem:[#allocation7 + $0x1b8] sm:$0xff]
    %v452 = vld [vmem:[#allocation7 + $0x1c0] sm:$0xff]
    %v453 = vld [vmem:[#allocation7 + $0x1c8] sm:$0xff]
    %v454 = vld [vmem:[#allocation7 + $0x1d0] sm:$0xff]
    %v455 = vld [vmem:[#allocation7 + $0x1d8] sm:$0xff]
    %v456 = vld [vmem:[#allocation7 + $0x1e0] sm:$0xff]
    %v457 = vld [vmem:[#allocation7 + $0x1e8] sm:$0xff]
    %v458 = vld [vmem:[#allocation7 + $0x1f0] sm:$0xff]
    %v459 = vld [vmem:[#allocation7 + $0x1f8] sm:$0xff]
    %v460 = vld [vmem:[%s4] sm:$0x3]
    %v462 = vlaneseq
    %v463 = vshrl.u32 %v462, 7
    %v464 = vsub.s32 0, %v463
    %v465 = vrot.slane %v460, %v464
    %v466 = vlaneseq
    %v467 = vshrl.u32 %v466, 7
    %v468 = vsub.s32 1, %v467
    %v469 = vrot.slane %v460, %v468
    %472 = vmatprep.subr.mxu0 %v397
    %473 = vmatpush1.msra.mxu0 %v396
    %474 = vmatprep.subr.mxu0 %v399
    %475 = vmatpush1.msra.mxu0 %v398
    %476 = vmatprep.subr.mxu0 %v401
    %477 = vmatpush1.msra.mxu0 %v400
    %478 = vmatprep.subr.mxu0 %v403
    %479 = vmatpush1.msra.mxu0 %v402
    %480 = vmatprep.subr.mxu0 %v405
    %481 = vmatpush1.msra.mxu0 %v404
    %482 = vmatprep.subr.mxu0 %v407
    %483 = vmatpush1.msra.mxu0 %v406
    %484 = vmatprep.subr.mxu0 %v409
    %485 = vmatpush1.msra.mxu0 %v408
    %486 = vmatprep.subr.mxu0 %v411
    %487 = vmatpush1.msra.mxu0 %v410
    %488 = vmatprep.subr.mxu0 %v413
    %489 = vmatpush1.msra.mxu0 %v412
    %490 = vmatprep.subr.mxu0 %v415
    %491 = vmatpush1.msra.mxu0 %v414
    %492 = vmatprep.subr.mxu0 %v417
    %493 = vmatpush1.msra.mxu0 %v416
    %494 = vmatprep.subr.mxu0 %v419
    %495 = vmatpush1.msra.mxu0 %v418
    %496 = vmatprep.subr.mxu0 %v421
    %497 = vmatpush1.msra.mxu0 %v420
    %498 = vmatprep.subr.mxu0 %v423
    %499 = vmatpush1.msra.mxu0 %v422
    %500 = vmatprep.subr.mxu0 %v425
    %501 = vmatpush1.msra.mxu0 %v424
    %502 = vmatprep.subr.mxu0 %v427
    %503 = vmatpush1.msra.mxu0 %v426
    %504 = vmatprep.subr.mxu0 %v429
    %505 = vmatpush1.msra.mxu0 %v428
    %506 = vmatprep.subr.mxu0 %v431
    %507 = vmatpush1.msra.mxu0 %v430
    %508 = vmatprep.subr.mxu0 %v433
    %509 = vmatpush1.msra.mxu0 %v432
    %510 = vmatprep.subr.mxu0 %v435
    %511 = vmatpush1.msra.mxu0 %v434
    %512 = vmatprep.subr.mxu0 %v437
    %513 = vmatpush1.msra.mxu0 %v436
    %514 = vmatprep.subr.mxu0 %v439
    %515 = vmatpush1.msra.mxu0 %v438
    %516 = vmatprep.subr.mxu0 %v441
    %517 = vmatpush1.msra.mxu0 %v440
    %518 = vmatprep.subr.mxu0 %v443
    %519 = vmatpush1.msra.mxu0 %v442
    %520 = vmatprep.subr.mxu0 %v445
    %521 = vmatpush1.msra.mxu0 %v444
    %522 = vmatprep.subr.mxu0 %v447
    %523 = vmatpush1.msra.mxu0 %v446
    %524 = vmatprep.subr.mxu0 %v449
    %525 = vmatpush1.msra.mxu0 %v448
    %526 = vmatprep.subr.mxu0 %v451
    %527 = vmatpush1.msra.mxu0 %v450
    %528 = vmatprep.subr.mxu0 %v453
    %529 = vmatpush1.msra.mxu0 %v452
    %530 = vmatprep.subr.mxu0 %v455
    %531 = vmatpush1.msra.mxu0 %v454
    %532 = vmatprep.subr.mxu0 %v457
    %533 = vmatpush1.msra.mxu0 %v456
    %534 = vmatprep.subr.mxu0 %v459
    %535 = vmatpush1.msra.mxu0 %v458
    %536 = vmatprep.mubr.f32.mxu0 %v365
    %537 = vmatmul.mubr.f32.gmra.mrb[0].mxu0 %v364
    %v538 = vpop.f32.mrb[0].mxu0
    %v539 = vadd.f32 %v465, %v538
    %v540 = vpop.f32.mrb[0].mxu0
    %v541 = vadd.f32 %v469, %v540
    %542 = vmatprep.mubr.f32.mxu0 %v367
    %543 = vmatmul.mubr.f32.gmra.mrb[0].mxu0 %v366
    %v544 = vpop.f32.mrb[0].mxu0
    %v545 = vadd.f32 %v465, %v544
    %v546 = vpop.f32.mrb[0].mxu0
    %v547 = vadd.f32 %v469, %v546
    %548 = vmatprep.mubr.f32.mxu0 %v369
    %549 = vmatmul.mubr.f32.gmra.mrb[0].mxu0 %v368
    %v550 = vpop.f32.mrb[0].mxu0
    %v551 = vadd.f32 %v465, %v550
    %v552 = vpop.f32.mrb[0].mxu0
    %v553 = vadd.f32 %v469, %v552
    %554 = vmatprep.mubr.f32.mxu0 %v371
    %555 = vmatmul.mubr.f32.gmra.mrb[0].mxu0 %v370
    %v556 = vpop.f32.mrb[0].mxu0
    %v557 = vadd.f32 %v465, %v556
    %v558 = vpop.f32.mrb[0].mxu0
    %v559 = vadd.f32 %v469, %v558
    %560 = vmatprep.mubr.f32.mxu0 %v373
    %561 = vmatmul.mubr.f32.gmra.mrb[0].mxu0 %v372
    %v562 = vpop.f32.mrb[0].mxu0
    %v563 = vadd.f32 %v465, %v562
    %v564 = vpop.f32.mrb[0].mxu0
    %v565 = vadd.f32 %v469, %v564
    %566 = vmatprep.mubr.f32.mxu0 %v375
    %567 = vmatmul.mubr.f32.gmra.mrb[0].mxu0 %v374
    %v568 = vpop.f32.mrb[0].mxu0
    %v569 = vadd.f32 %v465, %v568
    %v570 = vpop.f32.mrb[0].mxu0
    %v571 = vadd.f32 %v469, %v570
    %572 = vmatprep.mubr.f32.mxu0 %v377
    %573 = vmatmul.mubr.f32.gmra.mrb[0].mxu0 %v376
    %v574 = vpop.f32.mrb[0].mxu0
    %v575 = vadd.f32 %v465, %v574
    %v576 = vpop.f32.mrb[0].mxu0
    %v577 = vadd.f32 %v469, %v576
    %578 = vmatprep.mubr.f32.mxu0 %v379
    %579 = vmatmul.mubr.f32.gmra.mrb[0].mxu0 %v378
    %v580 = vpop.f32.mrb[0].mxu0
    %v581 = vadd.f32 %v465, %v580
    %v582 = vpop.f32.mrb[0].mxu0
    %v583 = vadd.f32 %v469, %v582
    %584 = vmatprep.mubr.f32.mxu0 %v381
    %585 = vmatmul.mubr.f32.gmra.mrb[0].mxu0 %v380
    %v586 = vpop.f32.mrb[0].mxu0
    %v587 = vadd.f32 %v465, %v586
    %v588 = vpop.f32.mrb[0].mxu0
    %v589 = vadd.f32 %v469, %v588
    %590 = vmatprep.mubr.f32.mxu0 %v383
    %591 = vmatmul.mubr.f32.gmra.mrb[0].mxu0 %v382
    %v592 = vpop.f32.mrb[0].mxu0
    %v593 = vadd.f32 %v465, %v592
    %v594 = vpop.f32.mrb[0].mxu0
    %v595 = vadd.f32 %v469, %v594
    %596 = vmatprep.mubr.f32.mxu0 %v385
    %597 = vmatmul.mubr.f32.gmra.mrb[0].mxu0 %v384
    %v598 = vpop.f32.mrb[0].mxu0
    %v599 = vadd.f32 %v465, %v598
    %v600 = vpop.f32.mrb[0].mxu0
    %v601 = vadd.f32 %v469, %v600
    %602 = vmatprep.mubr.f32.mxu0 %v387
    %603 = vmatmul.mubr.f32.gmra.mrb[0].mxu0 %v386
    %v604 = vpop.f32.mrb[0].mxu0
    %v605 = vadd.f32 %v465, %v604
    %v606 = vpop.f32.mrb[0].mxu0
    %v607 = vadd.f32 %v469, %v606
    %608 = vmatprep.mubr.f32.mxu0 %v389
    %609 = vmatmul.mubr.f32.gmra.mrb[0].mxu0 %v388
    %v610 = vpop.f32.mrb[0].mxu0
    %v611 = vadd.f32 %v465, %v610
    %v612 = vpop.f32.mrb[0].mxu0
    %v613 = vadd.f32 %v469, %v612
    %614 = vmatprep.mubr.f32.mxu0 %v391
    %615 = vmatmul.mubr.f32.gmra.mrb[0].mxu0 %v390
    %v616 = vpop.f32.mrb[0].mxu0
    %v617 = vadd.f32 %v465, %v616
    %v618 = vpop.f32.mrb[0].mxu0
    %v619 = vadd.f32 %v469, %v618
    %620 = vmatprep.mubr.f32.mxu0 %v393
    %621 = vmatmul.mubr.f32.gmra.mrb[0].mxu0 %v392
    %v622 = vpop.f32.mrb[0].mxu0
    %v623 = vadd.f32 %v465, %v622
    %v624 = vpop.f32.mrb[0].mxu0
    %v625 = vadd.f32 %v469, %v624
    %626 = vmatprep.mubr.f32.mxu0 %v395
    %627 = vmatmul.mubr.f32.gmra.mrb[0].mxu0 %v394
    %v628 = vpop.f32.mrb[0].mxu0
    %v629 = vadd.f32 %v465, %v628
    %v630 = vpop.f32.mrb[0].mxu0
    %v631 = vadd.f32 %v469, %v630
    %632 = vdwg.mxu0
    %v633 = vmax.f32 %v539, 0.0
    %v634 = vmax.f32 %v541, 0.0
    %v635 = vmax.f32 %v545, 0.0
    %v636 = vmax.f32 %v547, 0.0
    %v637 = vmax.f32 %v551, 0.0
    %v638 = vmax.f32 %v553, 0.0
    %v639 = vmax.f32 %v557, 0.0
    %v640 = vmax.f32 %v559, 0.0
    %v641 = vmax.f32 %v563, 0.0
    %v642 = vmax.f32 %v565, 0.0
    %v643 = vmax.f32 %v569, 0.0
    %v644 = vmax.f32 %v571, 0.0
    %v645 = vmax.f32 %v575, 0.0
    %v646 = vmax.f32 %v577, 0.0
    %v647 = vmax.f32 %v581, 0.0
    %v648 = vmax.f32 %v583, 0.0
    %v649 = vmax.f32 %v587, 0.0
    %v650 = vmax.f32 %v589, 0.0
    %v651 = vmax.f32 %v593, 0.0
    %v652 = vmax.f32 %v595, 0.0
    %v653 = vmax.f32 %v599, 0.0
    %v654 = vmax.f32 %v601, 0.0
    %v655 = vmax.f32 %v605, 0.0
    %v656 = vmax.f32 %v607, 0.0
    %v657 = vmax.f32 %v611, 0.0
    %v658 = vmax.f32 %v613, 0.0
    %v659 = vmax.f32 %v617, 0.0
    %v660 = vmax.f32 %v619, 0.0
    %v661 = vmax.f32 %v623, 0.0
    %v662 = vmax.f32 %v625, 0.0
    %v663 = vmax.f32 %v629, 0.0
    %v664 = vmax.f32 %v631, 0.0
    %v665 = vld [vmem:[#allocation8] sm:$0xff]
    %v666 = vld [vmem:[#allocation8 + $0x8] sm:$0xff]
    %v667 = vld [vmem:[#allocation8 + $0x10] sm:$0xff]
    %v668 = vld [vmem:[#allocation8 + $0x18] sm:$0xff]
    %v669 = vld [vmem:[#allocation8 + $0x20] sm:$0xff]
    %v670 = vld [vmem:[#allocation8 + $0x28] sm:$0xff]
    %v671 = vld [vmem:[#allocation8 + $0x30] sm:$0xff]
    %v672 = vld [vmem:[#allocation8 + $0x38] sm:$0xff]
    %v673 = vld [vmem:[#allocation8 + $0x40] sm:$0xff]
    %v674 = vld [vmem:[#allocation8 + $0x48] sm:$0xff]
    %v675 = vld [vmem:[#allocation8 + $0x50] sm:$0xff]
    %v676 = vld [vmem:[#allocation8 + $0x58] sm:$0xff]
    %v677 = vld [vmem:[#allocation8 + $0x60] sm:$0xff]
    %v678 = vld [vmem:[#allocation8 + $0x68] sm:$0xff]
    %v679 = vld [vmem:[#allocation8 + $0x70] sm:$0xff]
    %v680 = vld [vmem:[#allocation8 + $0x78] sm:$0xff]
    %v681 = vld [vmem:[#allocation8 + $0x80] sm:$0xff]
    %v682 = vld [vmem:[#allocation8 + $0x88] sm:$0xff]
    %v683 = vld [vmem:[#allocation8 + $0x90] sm:$0xff]
    %v684 = vld [vmem:[#allocation8 + $0x98] sm:$0xff]
    %v685 = vld [vmem:[#allocation8 + $0xa0] sm:$0xff]
    %v686 = vld [vmem:[#allocation8 + $0xa8] sm:$0xff]
    %v687 = vld [vmem:[#allocation8 + $0xb0] sm:$0xff]
    %v688 = vld [vmem:[#allocation8 + $0xb8] sm:$0xff]
    %v689 = vld [vmem:[#allocation8 + $0xc0] sm:$0xff]
    %v690 = vld [vmem:[#allocation8 + $0xc8] sm:$0xff]
    %v691 = vld [vmem:[#allocation8 + $0xd0] sm:$0xff]
    %v692 = vld [vmem:[#allocation8 + $0xd8] sm:$0xff]
    %v693 = vld [vmem:[#allocation8 + $0xe0] sm:$0xff]
    %v694 = vld [vmem:[#allocation8 + $0xe8] sm:$0xff]
    %v695 = vld [vmem:[#allocation8 + $0xf0] sm:$0xff]
    %v696 = vld [vmem:[#allocation8 + $0xf8] sm:$0xff]
    %v697 = vld [vmem:[%s6] sm:$0x1]
    %v699 = vlaneseq
    %v700 = vshrl.u32 %v699, 7
    %v701 = vsub.s32 0, %v700
    %v702 = vrot.slane %v697, %v701
    %704 = vmatprep.subr.mxu0 0.0
    %705 = vmatpush1.msra.mxu0 %v665
    %706 = vmatprep.subr.mxu0 0.0
    %707 = vmatpush1.msra.mxu0 %v666
    %708 = vmatprep.subr.mxu0 0.0
    %709 = vmatpush1.msra.mxu0 %v667
    %710 = vmatprep.subr.mxu0 0.0
    %711 = vmatpush1.msra.mxu0 %v668
    %712 = vmatprep.subr.mxu0 0.0
    %713 = vmatpush1.msra.mxu0 %v669
    %714 = vmatprep.subr.mxu0 0.0
    %715 = vmatpush1.msra.mxu0 %v670
    %716 = vmatprep.subr.mxu0 0.0
    %717 = vmatpush1.msra.mxu0 %v671
    %718 = vmatprep.subr.mxu0 0.0
    %719 = vmatpush1.msra.mxu0 %v672
    %720 = vmatprep.subr.mxu0 0.0
    %721 = vmatpush1.msra.mxu0 %v673
    %722 = vmatprep.subr.mxu0 0.0
    %723 = vmatpush1.msra.mxu0 %v674
    %724 = vmatprep.subr.mxu0 0.0
    %725 = vmatpush1.msra.mxu0 %v675
    %726 = vmatprep.subr.mxu0 0.0
    %727 = vmatpush1.msra.mxu0 %v676
    %728 = vmatprep.subr.mxu0 0.0
    %729 = vmatpush1.msra.mxu0 %v677
    %730 = vmatprep.subr.mxu0 0.0
    %731 = vmatpush1.msra.mxu0 %v678
    %732 = vmatprep.subr.mxu0 0.0
    %733 = vmatpush1.msra.mxu0 %v679
    %734 = vmatprep.subr.mxu0 0.0
    %735 = vmatpush1.msra.mxu0 %v680
    %736 = vmatprep.subr.mxu0 0.0
    %737 = vmatpush1.msra.mxu0 %v681
    %738 = vmatprep.subr.mxu0 0.0
    %739 = vmatpush1.msra.mxu0 %v682
    %740 = vmatprep.subr.mxu0 0.0
    %741 = vmatpush1.msra.mxu0 %v683
    %742 = vmatprep.subr.mxu0 0.0
    %743 = vmatpush1.msra.mxu0 %v684
    %744 = vmatprep.subr.mxu0 0.0
    %745 = vmatpush1.msra.mxu0 %v685
    %746 = vmatprep.subr.mxu0 0.0
    %747 = vmatpush1.msra.mxu0 %v686
    %748 = vmatprep.subr.mxu0 0.0
    %749 = vmatpush1.msra.mxu0 %v687
    %750 = vmatprep.subr.mxu0 0.0
    %751 = vmatpush1.msra.mxu0 %v688
    %752 = vmatprep.subr.mxu0 0.0
    %753 = vmatpush1.msra.mxu0 %v689
    %754 = vmatprep.subr.mxu0 0.0
    %755 = vmatpush1.msra.mxu0 %v690
    %756 = vmatprep.subr.mxu0 0.0
    %757 = vmatpush1.msra.mxu0 %v691
    %758 = vmatprep.subr.mxu0 0.0
    %759 = vmatpush1.msra.mxu0 %v692
    %760 = vmatprep.subr.mxu0 0.0
    %761 = vmatpush1.msra.mxu0 %v693
    %762 = vmatprep.subr.mxu0 0.0
    %763 = vmatpush1.msra.mxu0 %v694
    %764 = vmatprep.subr.mxu0 0.0
    %765 = vmatpush1.msra.mxu0 %v695
    %766 = vmatprep.subr.mxu0 0.0
    %767 = vmatpush1.msra.mxu0 %v696
    %768 = vmatprep.mubr.f32.mxu0 %v634
    %769 = vmatmul.mubr.f32.gmra.mrb[0].mxu0 %v633
    %v770 = vpop.f32.mrb[0].mxu0
    %v771 = vadd.f32 %v702, %v770
    %v772 = vpop.f32.mrb[0].mxu0
    %773 = vmatprep.mubr.f32.mxu0 %v636
    %774 = vmatmul.mubr.f32.gmra.mrb[0].mxu0 %v635
    %v775 = vpop.f32.mrb[0].mxu0
    %v776 = vadd.f32 %v702, %v775
    %v777 = vpop.f32.mrb[0].mxu0
    %778 = vmatprep.mubr.f32.mxu0 %v638
    %779 = vmatmul.mubr.f32.gmra.mrb[0].mxu0 %v637
    %v780 = vpop.f32.mrb[0].mxu0
    %v781 = vadd.f32 %v702, %v780
    %v782 = vpop.f32.mrb[0].mxu0
    %783 = vmatprep.mubr.f32.mxu0 %v640
    %784 = vmatmul.mubr.f32.gmra.mrb[0].mxu0 %v639
    %v785 = vpop.f32.mrb[0].mxu0
    %v786 = vadd.f32 %v702, %v785
    %v787 = vpop.f32.mrb[0].mxu0
    %788 = vmatprep.mubr.f32.mxu0 %v642
    %789 = vmatmul.mubr.f32.gmra.mrb[0].mxu0 %v641
    %v790 = vpop.f32.mrb[0].mxu0
    %v791 = vadd.f32 %v702, %v790
    %v792 = vpop.f32.mrb[0].mxu0
    %793 = vmatprep.mubr.f32.mxu0 %v644
    %794 = vmatmul.mubr.f32.gmra.mrb[0].mxu0 %v643
    %v795 = vpop.f32.mrb[0].mxu0
    %v796 = vadd.f32 %v702, %v795
    %v797 = vpop.f32.mrb[0].mxu0
    %798 = vmatprep.mubr.f32.mxu0 %v646
    %799 = vmatmul.mubr.f32.gmra.mrb[0].mxu0 %v645
    %v800 = vpop.f32.mrb[0].mxu0
    %v801 = vadd.f32 %v702, %v800
    %v802 = vpop.f32.mrb[0].mxu0
    %803 = vmatprep.mubr.f32.mxu0 %v648
    %804 = vmatmul.mubr.f32.gmra.mrb[0].mxu0 %v647
    %v805 = vpop.f32.mrb[0].mxu0
    %v806 = vadd.f32 %v702, %v805
    %v807 = vpop.f32.mrb[0].mxu0
    %808 = vmatprep.mubr.f32.mxu0 %v650
    %809 = vmatmul.mubr.f32.gmra.mrb[0].mxu0 %v649
    %v810 = vpop.f32.mrb[0].mxu0
    %v811 = vadd.f32 %v702, %v810
    %v812 = vpop.f32.mrb[0].mxu0
    %813 = vmatprep.mubr.f32.mxu0 %v652
    %814 = vmatmul.mubr.f32.gmra.mrb[0].mxu0 %v651
    %v815 = vpop.f32.mrb[0].mxu0
    %v816 = vadd.f32 %v702, %v815
    %v817 = vpop.f32.mrb[0].mxu0
    %818 = vmatprep.mubr.f32.mxu0 %v654
    %819 = vmatmul.mubr.f32.gmra.mrb[0].mxu0 %v653
    %v820 = vpop.f32.mrb[0].mxu0
    %v821 = vadd.f32 %v702, %v820
    %v822 = vpop.f32.mrb[0].mxu0
    %823 = vmatprep.mubr.f32.mxu0 %v656
    %824 = vmatmul.mubr.f32.gmra.mrb[0].mxu0 %v655
    %v825 = vpop.f32.mrb[0].mxu0
    %v826 = vadd.f32 %v702, %v825
    %v827 = vpop.f32.mrb[0].mxu0
    %828 = vmatprep.mubr.f32.mxu0 %v658
    %829 = vmatmul.mubr.f32.gmra.mrb[0].mxu0 %v657
    %v830 = vpop.f32.mrb[0].mxu0
    %v831 = vadd.f32 %v702, %v830
    %v832 = vpop.f32.mrb[0].mxu0
    %833 = vmatprep.mubr.f32.mxu0 %v660
    %834 = vmatmul.mubr.f32.gmra.mrb[0].mxu0 %v659
    %v835 = vpop.f32.mrb[0].mxu0
    %v836 = vadd.f32 %v702, %v835
    %v837 = vpop.f32.mrb[0].mxu0
    %838 = vmatprep.mubr.f32.mxu0 %v662
    %839 = vmatmul.mubr.f32.gmra.mrb[0].mxu0 %v661
    %v840 = vpop.f32.mrb[0].mxu0
    %v841 = vadd.f32 %v702, %v840
    %v842 = vpop.f32.mrb[0].mxu0
    %843 = vmatprep.mubr.f32.mxu0 %v664
    %844 = vmatmul.mubr.f32.gmra.mrb[0].mxu0 %v663
    %v845 = vpop.f32.mrb[0].mxu0
    %v846 = vadd.f32 %v702, %v845
    %v847 = vpop.f32.mrb[0].mxu0
    %848 = vdwg.mxu0
    %849 = vst [vmem:[#allocation14] sm:$0xff] %v771
    %850 = vst [vmem:[#allocation14 + $0x8] sm:$0xff] %v776
    %851 = vst [vmem:[#allocation14 + $0x10] sm:$0xff] %v781
    %852 = vst [vmem:[#allocation14 + $0x18] sm:$0xff] %v786
    %853 = vst [vmem:[#allocation14 + $0x20] sm:$0xff] %v791
    %854 = vst [vmem:[#allocation14 + $0x28] sm:$0xff] %v796
    %855 = vst [vmem:[#allocation14 + $0x30] sm:$0xff] %v801
    %856 = vst [vmem:[#allocation14 + $0x38] sm:$0xff] %v806
    %857 = vst [vmem:[#allocation14 + $0x40] sm:$0xff] %v811
    %858 = vst [vmem:[#allocation14 + $0x48] sm:$0xff] %v816
    %859 = vst [vmem:[#allocation14 + $0x50] sm:$0xff] %v821
    %860 = vst [vmem:[#allocation14 + $0x58] sm:$0xff] %v826
    %861 = vst [vmem:[#allocation14 + $0x60] sm:$0xff] %v831
    %862 = vst [vmem:[#allocation14 + $0x68] sm:$0xff] %v836
    %863 = vst [vmem:[#allocation14 + $0x70] sm:$0xff] %v841
    %864 = vst [vmem:[#allocation14 + $0x78] sm:$0xff] %v846
    %v865 = vld [vmem:[#allocation10] sm:$0xff]
    %v866 = vld [vmem:[#allocation10 + $0x8] sm:$0xff]
    %v867 = vld [vmem:[#allocation10 + $0x10] sm:$0xff]
    %v868 = vld [vmem:[#allocation10 + $0x18] sm:$0xff]
    %v869 = vld [vmem:[#allocation10 + $0x20] sm:$0xff]
    %v870 = vld [vmem:[#allocation10 + $0x28] sm:$0xff]
    %v871 = vld [vmem:[#allocation10 + $0x30] sm:$0xff]
    %v872 = vld [vmem:[#allocation10 + $0x38] sm:$0xff]
    %v873 = vld [vmem:[#allocation10 + $0x40] sm:$0xff]
    %v874 = vld [vmem:[#allocation10 + $0x48] sm:$0xff]
    %v875 = vld [vmem:[#allocation10 + $0x50] sm:$0xff]
    %v876 = vld [vmem:[#allocation10 + $0x58] sm:$0xff]
    %v877 = vld [vmem:[#allocation10 + $0x60] sm:$0xff]
    %v878 = vld [vmem:[#allocation10 + $0x68] sm:$0xff]
    %v879 = vld [vmem:[#allocation10 + $0x70] sm:$0xff]
    %v880 = vld [vmem:[#allocation10 + $0x78] sm:$0xff]
    %v881 = vld [vmem:[#allocation10 + $0x80] sm:$0xff]
    %v882 = vld [vmem:[#allocation10 + $0x88] sm:$0xff]
    %v883 = vld [vmem:[#allocation10 + $0x90] sm:$0xff]
    %v884 = vld [vmem:[#allocation10 + $0x98] sm:$0xff]
    %v885 = vld [vmem:[#allocation10 + $0xa0] sm:$0xff]
    %v886 = vld [vmem:[#allocation10 + $0xa8] sm:$0xff]
    %v887 = vld [vmem:[#allocation10 + $0xb0] sm:$0xff]
    %v888 = vld [vmem:[#allocation10 + $0xb8] sm:$0xff]
    %v889 = vld [vmem:[#allocation10 + $0xc0] sm:$0xff]
    %v890 = vld [vmem:[#allocation10 + $0xc8] sm:$0xff]
    %v891 = vld [vmem:[#allocation10 + $0xd0] sm:$0xff]
    %v892 = vld [vmem:[#allocation10 + $0xd8] sm:$0xff]
    %v893 = vld [vmem:[#allocation10 + $0xe0] sm:$0xff]
    %v894 = vld [vmem:[#allocation10 + $0xe8] sm:$0xff]
    %v895 = vld [vmem:[#allocation10 + $0xf0] sm:$0xff]
    %v896 = vld [vmem:[#allocation10 + $0xf8] sm:$0xff]
    %v897 = vld [vmem:[%s8] sm:$0x3]
    %v899 = vlaneseq
    %v900 = vshrl.u32 %v899, 7
    %v901 = vsub.s32 0, %v900
    %v902 = vrot.slane %v897, %v901
    %v903 = vlaneseq
    %v904 = vshrl.u32 %v903, 7
    %v905 = vsub.s32 1, %v904
    %v906 = vrot.slane %v897, %v905
    %909 = vmatprep.subr.mxu0 %v866
    %910 = vmatpush1.msra.mxu0 %v865
    %911 = vmatprep.subr.mxu0 %v868
    %912 = vmatpush1.msra.mxu0 %v867
    %913 = vmatprep.subr.mxu0 %v870
    %914 = vmatpush1.msra.mxu0 %v869
    %915 = vmatprep.subr.mxu0 %v872
    %916 = vmatpush1.msra.mxu0 %v871
    %917 = vmatprep.subr.mxu0 %v874
    %918 = vmatpush1.msra.mxu0 %v873
    %919 = vmatprep.subr.mxu0 %v876
    %920 = vmatpush1.msra.mxu0 %v875
    %921 = vmatprep.subr.mxu0 %v878
    %922 = vmatpush1.msra.mxu0 %v877
    %923 = vmatprep.subr.mxu0 %v880
    %924 = vmatpush1.msra.mxu0 %v879
    %925 = vmatprep.subr.mxu0 %v882
    %926 = vmatpush1.msra.mxu0 %v881
    %927 = vmatprep.subr.mxu0 %v884
    %928 = vmatpush1.msra.mxu0 %v883
    %929 = vmatprep.subr.mxu0 %v886
    %930 = vmatpush1.msra.mxu0 %v885
    %931 = vmatprep.subr.mxu0 %v888
    %932 = vmatpush1.msra.mxu0 %v887
    %933 = vmatprep.subr.mxu0 %v890
    %934 = vmatpush1.msra.mxu0 %v889
    %935 = vmatprep.subr.mxu0 %v892
    %936 = vmatpush1.msra.mxu0 %v891
    %937 = vmatprep.subr.mxu0 %v894
    %938 = vmatpush1.msra.mxu0 %v893
    %939 = vmatprep.subr.mxu0 %v896
    %940 = vmatpush1.msra.mxu0 %v895
    %941 = vmatprep.subr.mxu0 0.0
    %942 = vmatpush1.msra.mxu0 0.0
    %943 = vmatprep.subr.mxu0 0.0
    %944 = vmatpush1.msra.mxu0 0.0
    %945 = vmatprep.subr.mxu0 0.0
    %946 = vmatpush1.msra.mxu0 0.0
    %947 = vmatprep.subr.mxu0 0.0
    %948 = vmatpush1.msra.mxu0 0.0
    %949 = vmatprep.subr.mxu0 0.0
    %950 = vmatpush1.msra.mxu0 0.0
    %951 = vmatprep.subr.mxu0 0.0
    %952 = vmatpush1.msra.mxu0 0.0
    %953 = vmatprep.subr.mxu0 0.0
    %954 = vmatpush1.msra.mxu0 0.0
    %955 = vmatprep.subr.mxu0 0.0
    %956 = vmatpush1.msra.mxu0 0.0
    %957 = vmatprep.subr.mxu0 0.0
    %958 = vmatpush1.msra.mxu0 0.0
    %959 = vmatprep.subr.mxu0 0.0
    %960 = vmatpush1.msra.mxu0 0.0
    %961 = vmatprep.subr.mxu0 0.0
    %962 = vmatpush1.msra.mxu0 0.0
    %963 = vmatprep.subr.mxu0 0.0
    %964 = vmatpush1.msra.mxu0 0.0
    %965 = vmatprep.subr.mxu0 0.0
    %966 = vmatpush1.msra.mxu0 0.0
    %967 = vmatprep.subr.mxu0 0.0
    %968 = vmatpush1.msra.mxu0 0.0
    %969 = vmatprep.subr.mxu0 0.0
    %970 = vmatpush1.msra.mxu0 0.0
    %971 = vmatprep.subr.mxu0 0.0
    %972 = vmatpush1.msra.mxu0 0.0
    %973 = vmatprep.mubr.f32.mxu0 0.0
    %974 = vmatmul.mubr.f32.gmra.mrb[0].mxu0 %v143
    %v975 = vpop.f32.mrb[0].mxu0
    %v976 = vadd.f32 %v902, %v975
    %v977 = vpop.f32.mrb[0].mxu0
    %v978 = vadd.f32 %v906, %v977
    %979 = vmatprep.mubr.f32.mxu0 0.0
    %980 = vmatmul.mubr.f32.gmra.mrb[0].mxu0 %v144
    %v981 = vpop.f32.mrb[0].mxu0
    %v982 = vadd.f32 %v902, %v981
    %v983 = vpop.f32.mrb[0].mxu0
    %v984 = vadd.f32 %v906, %v983
    %985 = vmatprep.mubr.f32.mxu0 0.0
    %986 = vmatmul.mubr.f32.gmra.mrb[0].mxu0 %v145
    %v987 = vpop.f32.mrb[0].mxu0
    %v988 = vadd.f32 %v902, %v987
    %v989 = vpop.f32.mrb[0].mxu0
    %v990 = vadd.f32 %v906, %v989
    %991 = vmatprep.mubr.f32.mxu0 0.0
    %992 = vmatmul.mubr.f32.gmra.mrb[0].mxu0 %v146
    %v993 = vpop.f32.mrb[0].mxu0
    %v994 = vadd.f32 %v902, %v993
    %v995 = vpop.f32.mrb[0].mxu0
    %v996 = vadd.f32 %v906, %v995
    %997 = vmatprep.mubr.f32.mxu0 0.0
    %998 = vmatmul.mubr.f32.gmra.mrb[0].mxu0 %v147
    %v999 = vpop.f32.mrb[0].mxu0
    %v1000 = vadd.f32 %v902, %v999
    %v1001 = vpop.f32.mrb[0].mxu0
    %v1002 = vadd.f32 %v906, %v1001
    %1003 = vmatprep.mubr.f32.mxu0 0.0
    %1004 = vmatmul.mubr.f32.gmra.mrb[0].mxu0 %v148
    %v1005 = vpop.f32.mrb[0].mxu0
    %v1006 = vadd.f32 %v902, %v1005
    %v1007 = vpop.f32.mrb[0].mxu0
    %v1008 = vadd.f32 %v906, %v1007
    %1009 = vmatprep.mubr.f32.mxu0 0.0
    %1010 = vmatmul.mubr.f32.gmra.mrb[0].mxu0 %v149
    %v1011 = vpop.f32.mrb[0].mxu0
    %v1012 = vadd.f32 %v902, %v1011
    %v1013 = vpop.f32.mrb[0].mxu0
    %v1014 = vadd.f32 %v906, %v1013
    %1015 = vmatprep.mubr.f32.mxu0 0.0
    %1016 = vmatmul.mubr.f32.gmra.mrb[0].mxu0 %v150
    %v1017 = vpop.f32.mrb[0].mxu0
    %v1018 = vadd.f32 %v902, %v1017
    %v1019 = vpop.f32.mrb[0].mxu0
    %v1020 = vadd.f32 %v906, %v1019
    %1021 = vmatprep.mubr.f32.mxu0 0.0
    %1022 = vmatmul.mubr.f32.gmra.mrb[0].mxu0 %v151
    %v1023 = vpop.f32.mrb[0].mxu0
    %v1024 = vadd.f32 %v902, %v1023
    %v1025 = vpop.f32.mrb[0].mxu0
    %v1026 = vadd.f32 %v906, %v1025
    %1027 = vmatprep.mubr.f32.mxu0 0.0
    %1028 = vmatmul.mubr.f32.gmra.mrb[0].mxu0 %v152
    %v1029 = vpop.f32.mrb[0].mxu0
    %v1030 = vadd.f32 %v902, %v1029
    %v1031 = vpop.f32.mrb[0].mxu0
    %v1032 = vadd.f32 %v906, %v1031
    %1033 = vmatprep.mubr.f32.mxu0 0.0
    %1034 = vmatmul.mubr.f32.gmra.mrb[0].mxu0 %v153
    %v1035 = vpop.f32.mrb[0].mxu0
    %v1036 = vadd.f32 %v902, %v1035
    %v1037 = vpop.f32.mrb[0].mxu0
    %v1038 = vadd.f32 %v906, %v1037
    %1039 = vmatprep.mubr.f32.mxu0 0.0
    %1040 = vmatmul.mubr.f32.gmra.mrb[0].mxu0 %v154
    %v1041 = vpop.f32.mrb[0].mxu0
    %v1042 = vadd.f32 %v902, %v1041
    %v1043 = vpop.f32.mrb[0].mxu0
    %v1044 = vadd.f32 %v906, %v1043
    %1045 = vmatprep.mubr.f32.mxu0 0.0
    %1046 = vmatmul.mubr.f32.gmra.mrb[0].mxu0 %v155
    %v1047 = vpop.f32.mrb[0].mxu0
    %v1048 = vadd.f32 %v902, %v1047
    %v1049 = vpop.f32.mrb[0].mxu0
    %v1050 = vadd.f32 %v906, %v1049
    %1051 = vmatprep.mubr.f32.mxu0 0.0
    %1052 = vmatmul.mubr.f32.gmra.mrb[0].mxu0 %v156
    %v1053 = vpop.f32.mrb[0].mxu0
    %v1054 = vadd.f32 %v902, %v1053
    %v1055 = vpop.f32.mrb[0].mxu0
    %v1056 = vadd.f32 %v906, %v1055
    %1057 = vmatprep.mubr.f32.mxu0 0.0
    %1058 = vmatmul.mubr.f32.gmra.mrb[0].mxu0 %v157
    %v1059 = vpop.f32.mrb[0].mxu0
    %v1060 = vadd.f32 %v902, %v1059
    %v1061 = vpop.f32.mrb[0].mxu0
    %v1062 = vadd.f32 %v906, %v1061
    %1063 = vmatprep.mubr.f32.mxu0 0.0
    %1064 = vmatmul.mubr.f32.gmra.mrb[0].mxu0 %v158
    %v1065 = vpop.f32.mrb[0].mxu0
    %v1066 = vadd.f32 %v902, %v1065
    %v1067 = vpop.f32.mrb[0].mxu0
    %v1068 = vadd.f32 %v906, %v1067
    %1069 = vdwg.mxu0
    %v1070 = vmax.f32 %v976, 0.0
    %v1071 = vmax.f32 %v978, 0.0
    %v1072 = vmax.f32 %v982, 0.0
    %v1073 = vmax.f32 %v984, 0.0
    %v1074 = vmax.f32 %v988, 0.0
    %v1075 = vmax.f32 %v990, 0.0
    %v1076 = vmax.f32 %v994, 0.0
    %v1077 = vmax.f32 %v996, 0.0
    %v1078 = vmax.f32 %v1000, 0.0
    %v1079 = vmax.f32 %v1002, 0.0
    %v1080 = vmax.f32 %v1006, 0.0
    %v1081 = vmax.f32 %v1008, 0.0
    %v1082 = vmax.f32 %v1012, 0.0
    %v1083 = vmax.f32 %v1014, 0.0
    %v1084 = vmax.f32 %v1018, 0.0
    %v1085 = vmax.f32 %v1020, 0.0
    %v1086 = vmax.f32 %v1024, 0.0
    %v1087 = vmax.f32 %v1026, 0.0
    %v1088 = vmax.f32 %v1030, 0.0
    %v1089 = vmax.f32 %v1032, 0.0
    %v1090 = vmax.f32 %v1036, 0.0
    %v1091 = vmax.f32 %v1038, 0.0
    %v1092 = vmax.f32 %v1042, 0.0
    %v1093 = vmax.f32 %v1044, 0.0
    %v1094 = vmax.f32 %v1048, 0.0
    %v1095 = vmax.f32 %v1050, 0.0
    %v1096 = vmax.f32 %v1054, 0.0
    %v1097 = vmax.f32 %v1056, 0.0
    %v1098 = vmax.f32 %v1060, 0.0
    %v1099 = vmax.f32 %v1062, 0.0
    %v1100 = vmax.f32 %v1066, 0.0
    %v1101 = vmax.f32 %v1068, 0.0
    %v1102 = vld [vmem:[#allocation11] sm:$0xff]
    %v1103 = vld [vmem:[#allocation11 + $0x8] sm:$0xff]
    %v1104 = vld [vmem:[#allocation11 + $0x10] sm:$0xff]
    %v1105 = vld [vmem:[#allocation11 + $0x18] sm:$0xff]
    %v1106 = vld [vmem:[#allocation11 + $0x20] sm:$0xff]
    %v1107 = vld [vmem:[#allocation11 + $0x28] sm:$0xff]
    %v1108 = vld [vmem:[#allocation11 + $0x30] sm:$0xff]
    %v1109 = vld [vmem:[#allocation11 + $0x38] sm:$0xff]
    %v1110 = vld [vmem:[#allocation11 + $0x40] sm:$0xff]
    %v1111 = vld [vmem:[#allocation11 + $0x48] sm:$0xff]
    %v1112 = vld [vmem:[#allocation11 + $0x50] sm:$0xff]
    %v1113 = vld [vmem:[#allocation11 + $0x58] sm:$0xff]
    %v1114 = vld [vmem:[#allocation11 + $0x60] sm:$0xff]
    %v1115 = vld [vmem:[#allocation11 + $0x68] sm:$0xff]
    %v1116 = vld [vmem:[#allocation11 + $0x70] sm:$0xff]
    %v1117 = vld [vmem:[#allocation11 + $0x78] sm:$0xff]
    %v1118 = vld [vmem:[#allocation11 + $0x80] sm:$0xff]
    %v1119 = vld [vmem:[#allocation11 + $0x88] sm:$0xff]
    %v1120 = vld [vmem:[#allocation11 + $0x90] sm:$0xff]
    %v1121 = vld [vmem:[#allocation11 + $0x98] sm:$0xff]
    %v1122 = vld [vmem:[#allocation11 + $0xa0] sm:$0xff]
    %v1123 = vld [vmem:[#allocation11 + $0xa8] sm:$0xff]
    %v1124 = vld [vmem:[#allocation11 + $0xb0] sm:$0xff]
    %v1125 = vld [vmem:[#allocation11 + $0xb8] sm:$0xff]
    %v1126 = vld [vmem:[#allocation11 + $0xc0] sm:$0xff]
    %v1127 = vld [vmem:[#allocation11 + $0xc8] sm:$0xff]
    %v1128 = vld [vmem:[#allocation11 + $0xd0] sm:$0xff]
    %v1129 = vld [vmem:[#allocation11 + $0xd8] sm:$0xff]
    %v1130 = vld [vmem:[#allocation11 + $0xe0] sm:$0xff]
    %v1131 = vld [vmem:[#allocation11 + $0xe8] sm:$0xff]
    %v1132 = vld [vmem:[#allocation11 + $0xf0] sm:$0xff]
    %v1133 = vld [vmem:[#allocation11 + $0xf8] sm:$0xff]
    %v1134 = vld [vmem:[#allocation11 + $0x100] sm:$0xff]
    %v1135 = vld [vmem:[#allocation11 + $0x108] sm:$0xff]
    %v1136 = vld [vmem:[#allocation11 + $0x110] sm:$0xff]
    %v1137 = vld [vmem:[#allocation11 + $0x118] sm:$0xff]
    %v1138 = vld [vmem:[#allocation11 + $0x120] sm:$0xff]
    %v1139 = vld [vmem:[#allocation11 + $0x128] sm:$0xff]
    %v1140 = vld [vmem:[#allocation11 + $0x130] sm:$0xff]
    %v1141 = vld [vmem:[#allocation11 + $0x138] sm:$0xff]
    %v1142 = vld [vmem:[#allocation11 + $0x140] sm:$0xff]
    %v1143 = vld [vmem:[#allocation11 + $0x148] sm:$0xff]
    %v1144 = vld [vmem:[#allocation11 + $0x150] sm:$0xff]
    %v1145 = vld [vmem:[#allocation11 + $0x158] sm:$0xff]
    %v1146 = vld [vmem:[#allocation11 + $0x160] sm:$0xff]
    %v1147 = vld [vmem:[#allocation11 + $0x168] sm:$0xff]
    %v1148 = vld [vmem:[#allocation11 + $0x170] sm:$0xff]
    %v1149 = vld [vmem:[#allocation11 + $0x178] sm:$0xff]
    %v1150 = vld [vmem:[#allocation11 + $0x180] sm:$0xff]
    %v1151 = vld [vmem:[#allocation11 + $0x188] sm:$0xff]
    %v1152 = vld [vmem:[#allocation11 + $0x190] sm:$0xff]
    %v1153 = vld [vmem:[#allocation11 + $0x198] sm:$0xff]
    %v1154 = vld [vmem:[#allocation11 + $0x1a0] sm:$0xff]
    %v1155 = vld [vmem:[#allocation11 + $0x1a8] sm:$0xff]
    %v1156 = vld [vmem:[#allocation11 + $0x1b0] sm:$0xff]
    %v1157 = vld [vmem:[#allocation11 + $0x1b8] sm:$0xff]
    %v1158 = vld [vmem:[#allocation11 + $0x1c0] sm:$0xff]
    %v1159 = vld [vmem:[#allocation11 + $0x1c8] sm:$0xff]
    %v1160 = vld [vmem:[#allocation11 + $0x1d0] sm:$0xff]
    %v1161 = vld [vmem:[#allocation11 + $0x1d8] sm:$0xff]
    %v1162 = vld [vmem:[#allocation11 + $0x1e0] sm:$0xff]
    %v1163 = vld [vmem:[#allocation11 + $0x1e8] sm:$0xff]
    %v1164 = vld [vmem:[#allocation11 + $0x1f0] sm:$0xff]
    %v1165 = vld [vmem:[#allocation11 + $0x1f8] sm:$0xff]
    %v1166 = vld [vmem:[%s10] sm:$0x3]
    %v1168 = vlaneseq
    %v1169 = vshrl.u32 %v1168, 7
    %v1170 = vsub.s32 0, %v1169
    %v1171 = vrot.slane %v1166, %v1170
    %v1172 = vlaneseq
    %v1173 = vshrl.u32 %v1172, 7
    %v1174 = vsub.s32 1, %v1173
    %v1175 = vrot.slane %v1166, %v1174
    %1178 = vmatprep.subr.mxu0 %v1103
    %1179 = vmatpush1.msra.mxu0 %v1102
    %1180 = vmatprep.subr.mxu0 %v1105
    %1181 = vmatpush1.msra.mxu0 %v1104
    %1182 = vmatprep.subr.mxu0 %v1107
    %1183 = vmatpush1.msra.mxu0 %v1106
    %1184 = vmatprep.subr.mxu0 %v1109
    %1185 = vmatpush1.msra.mxu0 %v1108
    %1186 = vmatprep.subr.mxu0 %v1111
    %1187 = vmatpush1.msra.mxu0 %v1110
    %1188 = vmatprep.subr.mxu0 %v1113
    %1189 = vmatpush1.msra.mxu0 %v1112
    %1190 = vmatprep.subr.mxu0 %v1115
    %1191 = vmatpush1.msra.mxu0 %v1114
    %1192 = vmatprep.subr.mxu0 %v1117
    %1193 = vmatpush1.msra.mxu0 %v1116
    %1194 = vmatprep.subr.mxu0 %v1119
    %1195 = vmatpush1.msra.mxu0 %v1118
    %1196 = vmatprep.subr.mxu0 %v1121
    %1197 = vmatpush1.msra.mxu0 %v1120
    %1198 = vmatprep.subr.mxu0 %v1123
    %1199 = vmatpush1.msra.mxu0 %v1122
    %1200 = vmatprep.subr.mxu0 %v1125
    %1201 = vmatpush1.msra.mxu0 %v1124
    %1202 = vmatprep.subr.mxu0 %v1127
    %1203 = vmatpush1.msra.mxu0 %v1126
    %1204 = vmatprep.subr.mxu0 %v1129
    %1205 = vmatpush1.msra.mxu0 %v1128
    %1206 = vmatprep.subr.mxu0 %v1131
    %1207 = vmatpush1.msra.mxu0 %v1130
    %1208 = vmatprep.subr.mxu0 %v1133
    %1209 = vmatpush1.msra.mxu0 %v1132
    %1210 = vmatprep.subr.mxu0 %v1135
    %1211 = vmatpush1.msra.mxu0 %v1134
    %1212 = vmatprep.subr.mxu0 %v1137
    %1213 = vmatpush1.msra.mxu0 %v1136
    %1214 = vmatprep.subr.mxu0 %v1139
    %1215 = vmatpush1.msra.mxu0 %v1138
    %1216 = vmatprep.subr.mxu0 %v1141
    %1217 = vmatpush1.msra.mxu0 %v1140
    %1218 = vmatprep.subr.mxu0 %v1143
    %1219 = vmatpush1.msra.mxu0 %v1142
    %1220 = vmatprep.subr.mxu0 %v1145
    %1221 = vmatpush1.msra.mxu0 %v1144
    %1222 = vmatprep.subr.mxu0 %v1147
    %1223 = vmatpush1.msra.mxu0 %v1146
    %1224 = vmatprep.subr.mxu0 %v1149
    %1225 = vmatpush1.msra.mxu0 %v1148
    %1226 = vmatprep.subr.mxu0 %v1151
    %1227 = vmatpush1.msra.mxu0 %v1150
    %1228 = vmatprep.subr.mxu0 %v1153
    %1229 = vmatpush1.msra.mxu0 %v1152
    %1230 = vmatprep.subr.mxu0 %v1155
    %1231 = vmatpush1.msra.mxu0 %v1154
    %1232 = vmatprep.subr.mxu0 %v1157
    %1233 = vmatpush1.msra.mxu0 %v1156
    %1234 = vmatprep.subr.mxu0 %v1159
    %1235 = vmatpush1.msra.mxu0 %v1158
    %1236 = vmatprep.subr.mxu0 %v1161
    %1237 = vmatpush1.msra.mxu0 %v1160
    %1238 = vmatprep.subr.mxu0 %v1163
    %1239 = vmatpush1.msra.mxu0 %v1162
    %1240 = vmatprep.subr.mxu0 %v1165
    %1241 = vmatpush1.msra.mxu0 %v1164
    %1242 = vmatprep.mubr.f32.mxu0 %v1071
    %1243 = vmatmul.mubr.f32.gmra.mrb[0].mxu0 %v1070
    %v1244 = vpop.f32.mrb[0].mxu0
    %v1245 = vadd.f32 %v1171, %v1244
    %v1246 = vpop.f32.mrb[0].mxu0
    %v1247 = vadd.f32 %v1175, %v1246
    %1248 = vmatprep.mubr.f32.mxu0 %v1073
    %1249 = vmatmul.mubr.f32.gmra.mrb[0].mxu0 %v1072
    %v1250 = vpop.f32.mrb[0].mxu0
    %v1251 = vadd.f32 %v1171, %v1250
    %v1252 = vpop.f32.mrb[0].mxu0
    %v1253 = vadd.f32 %v1175, %v1252
    %1254 = vmatprep.mubr.f32.mxu0 %v1075
    %1255 = vmatmul.mubr.f32.gmra.mrb[0].mxu0 %v1074
    %v1256 = vpop.f32.mrb[0].mxu0
    %v1257 = vadd.f32 %v1171, %v1256
    %v1258 = vpop.f32.mrb[0].mxu0
    %v1259 = vadd.f32 %v1175, %v1258
    %1260 = vmatprep.mubr.f32.mxu0 %v1077
    %1261 = vmatmul.mubr.f32.gmra.mrb[0].mxu0 %v1076
    %v1262 = vpop.f32.mrb[0].mxu0
    %v1263 = vadd.f32 %v1171, %v1262
    %v1264 = vpop.f32.mrb[0].mxu0
    %v1265 = vadd.f32 %v1175, %v1264
    %1266 = vmatprep.mubr.f32.mxu0 %v1079
    %1267 = vmatmul.mubr.f32.gmra.mrb[0].mxu0 %v1078
    %v1268 = vpop.f32.mrb[0].mxu0
    %v1269 = vadd.f32 %v1171, %v1268
    %v1270 = vpop.f32.mrb[0].mxu0
    %v1271 = vadd.f32 %v1175, %v1270
    %1272 = vmatprep.mubr.f32.mxu0 %v1081
    %1273 = vmatmul.mubr.f32.gmra.mrb[0].mxu0 %v1080
    %v1274 = vpop.f32.mrb[0].mxu0
    %v1275 = vadd.f32 %v1171, %v1274
    %v1276 = vpop.f32.mrb[0].mxu0
    %v1277 = vadd.f32 %v1175, %v1276
    %1278 = vmatprep.mubr.f32.mxu0 %v1083
    %1279 = vmatmul.mubr.f32.gmra.mrb[0].mxu0 %v1082
    %v1280 = vpop.f32.mrb[0].mxu0
    %v1281 = vadd.f32 %v1171, %v1280
    %v1282 = vpop.f32.mrb[0].mxu0
    %v1283 = vadd.f32 %v1175, %v1282
    %1284 = vmatprep.mubr.f32.mxu0 %v1085
    %1285 = vmatmul.mubr.f32.gmra.mrb[0].mxu0 %v1084
    %v1286 = vpop.f32.mrb[0].mxu0
    %v1287 = vadd.f32 %v1171, %v1286
    %v1288 = vpop.f32.mrb[0].mxu0
    %v1289 = vadd.f32 %v1175, %v1288
    %1290 = vmatprep.mubr.f32.mxu0 %v1087
    %1291 = vmatmul.mubr.f32.gmra.mrb[0].mxu0 %v1086
    %v1292 = vpop.f32.mrb[0].mxu0
    %v1293 = vadd.f32 %v1171, %v1292
    %v1294 = vpop.f32.mrb[0].mxu0
    %v1295 = vadd.f32 %v1175, %v1294
    %1296 = vmatprep.mubr.f32.mxu0 %v1089
    %1297 = vmatmul.mubr.f32.gmra.mrb[0].mxu0 %v1088
    %v1298 = vpop.f32.mrb[0].mxu0
    %v1299 = vadd.f32 %v1171, %v1298
    %v1300 = vpop.f32.mrb[0].mxu0
    %v1301 = vadd.f32 %v1175, %v1300
    %1302 = vmatprep.mubr.f32.mxu0 %v1091
    %1303 = vmatmul.mubr.f32.gmra.mrb[0].mxu0 %v1090
    %v1304 = vpop.f32.mrb[0].mxu0
    %v1305 = vadd.f32 %v1171, %v1304
    %v1306 = vpop.f32.mrb[0].mxu0
    %v1307 = vadd.f32 %v1175, %v1306
    %1308 = vmatprep.mubr.f32.mxu0 %v1093
    %1309 = vmatmul.mubr.f32.gmra.mrb[0].mxu0 %v1092
    %v1310 = vpop.f32.mrb[0].mxu0
    %v1311 = vadd.f32 %v1171, %v1310
    %v1312 = vpop.f32.mrb[0].mxu0
    %v1313 = vadd.f32 %v1175, %v1312
    %1314 = vmatprep.mubr.f32.mxu0 %v1095
    %1315 = vmatmul.mubr.f32.gmra.mrb[0].mxu0 %v1094
    %v1316 = vpop.f32.mrb[0].mxu0
    %v1317 = vadd.f32 %v1171, %v1316
    %v1318 = vpop.f32.mrb[0].mxu0
    %v1319 = vadd.f32 %v1175, %v1318
    %1320 = vmatprep.mubr.f32.mxu0 %v1097
    %1321 = vmatmul.mubr.f32.gmra.mrb[0].mxu0 %v1096
    %v1322 = vpop.f32.mrb[0].mxu0
    %v1323 = vadd.f32 %v1171, %v1322
    %v1324 = vpop.f32.mrb[0].mxu0
    %v1325 = vadd.f32 %v1175, %v1324
    %1326 = vmatprep.mubr.f32.mxu0 %v1099
    %1327 = vmatmul.mubr.f32.gmra.mrb[0].mxu0 %v1098
    %v1328 = vpop.f32.mrb[0].mxu0
    %v1329 = vadd.f32 %v1171, %v1328
    %v1330 = vpop.f32.mrb[0].mxu0
    %v1331 = vadd.f32 %v1175, %v1330
    %1332 = vmatprep.mubr.f32.mxu0 %v1101
    %1333 = vmatmul.mubr.f32.gmra.mrb[0].mxu0 %v1100
    %v1334 = vpop.f32.mrb[0].mxu0
    %v1335 = vadd.f32 %v1171, %v1334
    %v1336 = vpop.f32.mrb[0].mxu0
    %v1337 = vadd.f32 %v1175, %v1336
    %1338 = vdwg.mxu0
    %v1339 = vmax.f32 %v1245, 0.0
    %v1340 = vmax.f32 %v1247, 0.0
    %v1341 = vmax.f32 %v1251, 0.0
    %v1342 = vmax.f32 %v1253, 0.0
    %v1343 = vmax.f32 %v1257, 0.0
    %v1344 = vmax.f32 %v1259, 0.0
    %v1345 = vmax.f32 %v1263, 0.0
    %v1346 = vmax.f32 %v1265, 0.0
    %v1347 = vmax.f32 %v1269, 0.0
    %v1348 = vmax.f32 %v1271, 0.0
    %v1349 = vmax.f32 %v1275, 0.0
    %v1350 = vmax.f32 %v1277, 0.0
    %v1351 = vmax.f32 %v1281, 0.0
    %v1352 = vmax.f32 %v1283, 0.0
    %v1353 = vmax.f32 %v1287, 0.0
    %v1354 = vmax.f32 %v1289, 0.0
    %v1355 = vmax.f32 %v1293, 0.0
    %v1356 = vmax.f32 %v1295, 0.0
    %v1357 = vmax.f32 %v1299, 0.0
    %v1358 = vmax.f32 %v1301, 0.0
    %v1359 = vmax.f32 %v1305, 0.0
    %v1360 = vmax.f32 %v1307, 0.0
    %v1361 = vmax.f32 %v1311, 0.0
    %v1362 = vmax.f32 %v1313, 0.0
    %v1363 = vmax.f32 %v1317, 0.0
    %v1364 = vmax.f32 %v1319, 0.0
    %v1365 = vmax.f32 %v1323, 0.0
    %v1366 = vmax.f32 %v1325, 0.0
    %v1367 = vmax.f32 %v1329, 0.0
    %v1368 = vmax.f32 %v1331, 0.0
    %v1369 = vmax.f32 %v1335, 0.0
    %v1370 = vmax.f32 %v1337, 0.0
    %v1371 = vld [vmem:[#allocation13] sm:$0xff]
    %v1372 = vld [vmem:[#allocation13 + $0x8] sm:$0xff]
    %v1373 = vld [vmem:[#allocation13 + $0x10] sm:$0xff]
    %v1374 = vld [vmem:[#allocation13 + $0x18] sm:$0xff]
    %v1375 = vld [vmem:[#allocation13 + $0x20] sm:$0xff]
    %v1376 = vld [vmem:[#allocation13 + $0x28] sm:$0xff]
    %v1377 = vld [vmem:[#allocation13 + $0x30] sm:$0xff]
    %v1378 = vld [vmem:[#allocation13 + $0x38] sm:$0xff]
    %v1379 = vld [vmem:[#allocation13 + $0x40] sm:$0xff]
    %v1380 = vld [vmem:[#allocation13 + $0x48] sm:$0xff]
    %v1381 = vld [vmem:[#allocation13 + $0x50] sm:$0xff]
    %v1382 = vld [vmem:[#allocation13 + $0x58] sm:$0xff]
    %v1383 = vld [vmem:[#allocation13 + $0x60] sm:$0xff]
    %v1384 = vld [vmem:[#allocation13 + $0x68] sm:$0xff]
    %v1385 = vld [vmem:[#allocation13 + $0x70] sm:$0xff]
    %v1386 = vld [vmem:[#allocation13 + $0x78] sm:$0xff]
    %v1387 = vld [vmem:[#allocation13 + $0x80] sm:$0xff]
    %v1388 = vld [vmem:[#allocation13 + $0x88] sm:$0xff]
    %v1389 = vld [vmem:[#allocation13 + $0x90] sm:$0xff]
    %v1390 = vld [vmem:[#allocation13 + $0x98] sm:$0xff]
    %v1391 = vld [vmem:[#allocation13 + $0xa0] sm:$0xff]
    %v1392 = vld [vmem:[#allocation13 + $0xa8] sm:$0xff]
    %v1393 = vld [vmem:[#allocation13 + $0xb0] sm:$0xff]
    %v1394 = vld [vmem:[#allocation13 + $0xb8] sm:$0xff]
    %v1395 = vld [vmem:[#allocation13 + $0xc0] sm:$0xff]
    %v1396 = vld [vmem:[#allocation13 + $0xc8] sm:$0xff]
    %v1397 = vld [vmem:[#allocation13 + $0xd0] sm:$0xff]
    %v1398 = vld [vmem:[#allocation13 + $0xd8] sm:$0xff]
    %v1399 = vld [vmem:[#allocation13 + $0xe0] sm:$0xff]
    %v1400 = vld [vmem:[#allocation13 + $0xe8] sm:$0xff]
    %v1401 = vld [vmem:[#allocation13 + $0xf0] sm:$0xff]
    %v1402 = vld [vmem:[#allocation13 + $0xf8] sm:$0xff]
    %v1403 = vld [vmem:[%s12] sm:$0x1]
    %v1405 = vlaneseq
    %v1406 = vshrl.u32 %v1405, 7
    %v1407 = vsub.s32 0, %v1406
    %v1408 = vrot.slane %v1403, %v1407
    %1410 = vmatprep.subr.mxu0 0.0
    %1411 = vmatpush1.msra.mxu0 %v1371
    %1412 = vmatprep.subr.mxu0 0.0
    %1413 = vmatpush1.msra.mxu0 %v1372
    %1414 = vmatprep.subr.mxu0 0.0
    %1415 = vmatpush1.msra.mxu0 %v1373
    %1416 = vmatprep.subr.mxu0 0.0
    %1417 = vmatpush1.msra.mxu0 %v1374
    %1418 = vmatprep.subr.mxu0 0.0
    %1419 = vmatpush1.msra.mxu0 %v1375
    %1420 = vmatprep.subr.mxu0 0.0
    %1421 = vmatpush1.msra.mxu0 %v1376
    %1422 = vmatprep.subr.mxu0 0.0
    %1423 = vmatpush1.msra.mxu0 %v1377
    %1424 = vmatprep.subr.mxu0 0.0
    %1425 = vmatpush1.msra.mxu0 %v1378
    %1426 = vmatprep.subr.mxu0 0.0
    %1427 = vmatpush1.msra.mxu0 %v1379
    %1428 = vmatprep.subr.mxu0 0.0
    %1429 = vmatpush1.msra.mxu0 %v1380
    %1430 = vmatprep.subr.mxu0 0.0
    %1431 = vmatpush1.msra.mxu0 %v1381
    %1432 = vmatprep.subr.mxu0 0.0
    %1433 = vmatpush1.msra.mxu0 %v1382
    %1434 = vmatprep.subr.mxu0 0.0
    %1435 = vmatpush1.msra.mxu0 %v1383
    %1436 = vmatprep.subr.mxu0 0.0
    %1437 = vmatpush1.msra.mxu0 %v1384
    %1438 = vmatprep.subr.mxu0 0.0
    %1439 = vmatpush1.msra.mxu0 %v1385
    %1440 = vmatprep.subr.mxu0 0.0
    %1441 = vmatpush1.msra.mxu0 %v1386
    %1442 = vmatprep.subr.mxu0 0.0
    %1443 = vmatpush1.msra.mxu0 %v1387
    %1444 = vmatprep.subr.mxu0 0.0
    %1445 = vmatpush1.msra.mxu0 %v1388
    %1446 = vmatprep.subr.mxu0 0.0
    %1447 = vmatpush1.msra.mxu0 %v1389
    %1448 = vmatprep.subr.mxu0 0.0
    %1449 = vmatpush1.msra.mxu0 %v1390
    %1450 = vmatprep.subr.mxu0 0.0
    %1451 = vmatpush1.msra.mxu0 %v1391
    %1452 = vmatprep.subr.mxu0 0.0
    %1453 = vmatpush1.msra.mxu0 %v1392
    %1454 = vmatprep.subr.mxu0 0.0
    %1455 = vmatpush1.msra.mxu0 %v1393
    %1456 = vmatprep.subr.mxu0 0.0
    %1457 = vmatpush1.msra.mxu0 %v1394
    %1458 = vmatprep.subr.mxu0 0.0
    %1459 = vmatpush1.msra.mxu0 %v1395
    %1460 = vmatprep.subr.mxu0 0.0
    %1461 = vmatpush1.msra.mxu0 %v1396
    %1462 = vmatprep.subr.mxu0 0.0
    %1463 = vmatpush1.msra.mxu0 %v1397
    %1464 = vmatprep.subr.mxu0 0.0
    %1465 = vmatpush1.msra.mxu0 %v1398
    %1466 = vmatprep.subr.mxu0 0.0
    %1467 = vmatpush1.msra.mxu0 %v1399
    %1468 = vmatprep.subr.mxu0 0.0
    %1469 = vmatpush1.msra.mxu0 %v1400
    %1470 = vmatprep.subr.mxu0 0.0
    %1471 = vmatpush1.msra.mxu0 %v1401
    %1472 = vmatprep.subr.mxu0 0.0
    %1473 = vmatpush1.msra.mxu0 %v1402
    %1474 = vmatprep.mubr.f32.mxu0 %v1340
    %1475 = vmatmul.mubr.f32.gmra.mrb[0].mxu0 %v1339
    %v1476 = vpop.f32.mrb[0].mxu0
    %v1477 = vadd.f32 %v1408, %v1476
    %v1478 = vpop.f32.mrb[0].mxu0
    %1479 = vmatprep.mubr.f32.mxu0 %v1342
    %1480 = vmatmul.mubr.f32.gmra.mrb[0].mxu0 %v1341
    %v1481 = vpop.f32.mrb[0].mxu0
    %v1482 = vadd.f32 %v1408, %v1481
    %v1483 = vpop.f32.mrb[0].mxu0
    %1484 = vmatprep.mubr.f32.mxu0 %v1344
    %1485 = vmatmul.mubr.f32.gmra.mrb[0].mxu0 %v1343
    %v1486 = vpop.f32.mrb[0].mxu0
    %v1487 = vadd.f32 %v1408, %v1486
    %v1488 = vpop.f32.mrb[0].mxu0
    %1489 = vmatprep.mubr.f32.mxu0 %v1346
    %1490 = vmatmul.mubr.f32.gmra.mrb[0].mxu0 %v1345
    %v1491 = vpop.f32.mrb[0].mxu0
    %v1492 = vadd.f32 %v1408, %v1491
    %v1493 = vpop.f32.mrb[0].mxu0
    %1494 = vmatprep.mubr.f32.mxu0 %v1348
    %1495 = vmatmul.mubr.f32.gmra.mrb[0].mxu0 %v1347
    %v1496 = vpop.f32.mrb[0].mxu0
    %v1497 = vadd.f32 %v1408, %v1496
    %v1498 = vpop.f32.mrb[0].mxu0
    %1499 = vmatprep.mubr.f32.mxu0 %v1350
    %1500 = vmatmul.mubr.f32.gmra.mrb[0].mxu0 %v1349
    %v1501 = vpop.f32.mrb[0].mxu0
    %v1502 = vadd.f32 %v1408, %v1501
    %v1503 = vpop.f32.mrb[0].mxu0
    %1504 = vmatprep.mubr.f32.mxu0 %v1352
    %1505 = vmatmul.mubr.f32.gmra.mrb[0].mxu0 %v1351
    %v1506 = vpop.f32.mrb[0].mxu0
    %v1507 = vadd.f32 %v1408, %v1506
    %v1508 = vpop.f32.mrb[0].mxu0
    %1509 = vmatprep.mubr.f32.mxu0 %v1354
    %1510 = vmatmul.mubr.f32.gmra.mrb[0].mxu0 %v1353
    %v1511 = vpop.f32.mrb[0].mxu0
    %v1512 = vadd.f32 %v1408, %v1511
    %v1513 = vpop.f32.mrb[0].mxu0
    %1514 = vmatprep.mubr.f32.mxu0 %v1356
    %1515 = vmatmul.mubr.f32.gmra.mrb[0].mxu0 %v1355
    %v1516 = vpop.f32.mrb[0].mxu0
    %v1517 = vadd.f32 %v1408, %v1516
    %v1518 = vpop.f32.mrb[0].mxu0
    %1519 = vmatprep.mubr.f32.mxu0 %v1358
    %1520 = vmatmul.mubr.f32.gmra.mrb[0].mxu0 %v1357
    %v1521 = vpop.f32.mrb[0].mxu0
    %v1522 = vadd.f32 %v1408, %v1521
    %v1523 = vpop.f32.mrb[0].mxu0
    %1524 = vmatprep.mubr.f32.mxu0 %v1360
    %1525 = vmatmul.mubr.f32.gmra.mrb[0].mxu0 %v1359
    %v1526 = vpop.f32.mrb[0].mxu0
    %v1527 = vadd.f32 %v1408, %v1526
    %v1528 = vpop.f32.mrb[0].mxu0
    %1529 = vmatprep.mubr.f32.mxu0 %v1362
    %1530 = vmatmul.mubr.f32.gmra.mrb[0].mxu0 %v1361
    %v1531 = vpop.f32.mrb[0].mxu0
    %v1532 = vadd.f32 %v1408, %v1531
    %v1533 = vpop.f32.mrb[0].mxu0
    %1534 = vmatprep.mubr.f32.mxu0 %v1364
    %1535 = vmatmul.mubr.f32.gmra.mrb[0].mxu0 %v1363
    %v1536 = vpop.f32.mrb[0].mxu0
    %v1537 = vadd.f32 %v1408, %v1536
    %v1538 = vpop.f32.mrb[0].mxu0
    %1539 = vmatprep.mubr.f32.mxu0 %v1366
    %1540 = vmatmul.mubr.f32.gmra.mrb[0].mxu0 %v1365
    %v1541 = vpop.f32.mrb[0].mxu0
    %v1542 = vadd.f32 %v1408, %v1541
    %v1543 = vpop.f32.mrb[0].mxu0
    %1544 = vmatprep.mubr.f32.mxu0 %v1368
    %1545 = vmatmul.mubr.f32.gmra.mrb[0].mxu0 %v1367
    %v1546 = vpop.f32.mrb[0].mxu0
    %v1547 = vadd.f32 %v1408, %v1546
    %v1548 = vpop.f32.mrb[0].mxu0
    %1549 = vmatprep.mubr.f32.mxu0 %v1370
    %1550 = vmatmul.mubr.f32.gmra.mrb[0].mxu0 %v1369
    %v1551 = vpop.f32.mrb[0].mxu0
    %v1552 = vadd.f32 %v1408, %v1551
    %v1553 = vpop.f32.mrb[0].mxu0
    %1554 = vdwg.mxu0
    %1555 = vst [vmem:[#allocation15] sm:$0xff] %v1477
    %1556 = vst [vmem:[#allocation15 + $0x8] sm:$0xff] %v1482
    %1557 = vst [vmem:[#allocation15 + $0x10] sm:$0xff] %v1487
    %1558 = vst [vmem:[#allocation15 + $0x18] sm:$0xff] %v1492
    %1559 = vst [vmem:[#allocation15 + $0x20] sm:$0xff] %v1497
    %1560 = vst [vmem:[#allocation15 + $0x28] sm:$0xff] %v1502
    %1561 = vst [vmem:[#allocation15 + $0x30] sm:$0xff] %v1507
    %1562 = vst [vmem:[#allocation15 + $0x38] sm:$0xff] %v1512
    %1563 = vst [vmem:[#allocation15 + $0x40] sm:$0xff] %v1517
    %1564 = vst [vmem:[#allocation15 + $0x48] sm:$0xff] %v1522
    %1565 = vst [vmem:[#allocation15 + $0x50] sm:$0xff] %v1527
    %1566 = vst [vmem:[#allocation15 + $0x58] sm:$0xff] %v1532
    %1567 = vst [vmem:[#allocation15 + $0x60] sm:$0xff] %v1537
    %1568 = vst [vmem:[#allocation15 + $0x68] sm:$0xff] %v1542
    %1569 = vst [vmem:[#allocation15 + $0x70] sm:$0xff] %v1547
    %1570 = vst [vmem:[#allocation15 + $0x78] sm:$0xff] %v1552
    // Predicated region
    $region82: #{tpu_custom_call.1} parent=1 // pred_check
      _
    $region83: #{tpu_custom_call.1} parent=1 // pred_check_branch
      %1572 = sbr.rel (0) target = $region85
    $region84: #{tpu_custom_call.1} parent=1 // pred_region
      %s1574 = ssub.s32 2048, 2048
      %1575 = vsyncadd [#allocation4], %s1574
      %s1576 = sshll.u32 [#allocation14], 4
      %s1577 = int_to_ptr.vmem [resolvable:$true] %s1576
      %1582 = dma.vmem_to_hbm [thread:$0]  %s1577, 2048, %s13, [#allocation4], 128, 128, 8
    $region85: #{tpu_custom_call.1} parent=1 // pred_fallthru
      _
    // Predicated region
    $region86: #{tpu_custom_call.1} parent=1 // pred_check
      _
    $region87: #{tpu_custom_call.1} parent=1 // pred_check_branch
      %1584 = sbr.rel (0) target = $region89
    $region88: #{tpu_custom_call.1} parent=1 // pred_region
      %s1586 = ssub.s32 2048, 2048
      %1587 = vsyncadd [#allocation16], %s1586
      %s1588 = sshll.u32 [#allocation15], 4
      %s1589 = int_to_ptr.vmem [resolvable:$true] %s1588
      %1594 = dma.vmem_to_hbm [thread:$0]  %s1589, 2048, %s14, [#allocation16], 128, 128, 8
    $region89: #{tpu_custom_call.1} parent=1 // pred_fallthru
      _
    // Predicated region
    $region90: #{tpu_custom_call.1} parent=1 // pred_check
      _
    $region91: #{tpu_custom_call.1} parent=1 // pred_check_branch
      %1596 = sbr.rel (0) target = $region93
    $region92: #{tpu_custom_call.1} parent=1 // pred_region
      %1597 = dma.done [#allocation4], 2048
    $region93: #{tpu_custom_call.1} parent=1 // pred_fallthru
      _
    // Predicated region
    $region94: #{tpu_custom_call.1} parent=1 // pred_check
      _
    $region95: #{tpu_custom_call.1} parent=1 // pred_check_branch
      %1599 = sbr.rel (0) target = $region97
    $region96: #{tpu_custom_call.1} parent=1 // pred_region
      %1600 = dma.done [#allocation16], 2048
    $region97: #{tpu_custom_call.1} parent=1 // pred_fallthru
      _
    %1601 = vsyncpa [#allocation3], 1
    %1602 = vsyncpa [#allocation6], 1
    %1603 = vsyncpa [#allocation9], 1
    %1604 = vsyncpa [#allocation12], 1
    %1605 = vsyncpa [#allocation4], 1
    %1606 = vsyncpa [#allocation16], 1

</llo_original>
